<compile_context>
chip_gen: v7x
topology: tpu7x:2x2x1
jax: 0.10.0
libtpu: 0.0.40
codegen_flags: <defaults>
</compile_context>

<pallas_src>
import functools

import jax
import jax.numpy as jnp
from jax.experimental import pallas as pl
from jax.experimental.pallas import tpu as pltpu

THRESH = 0.5

_MAX_TT = 128                           # cap on fused timesteps (unroll length)
_WEIGHT_TILE_LIMIT = 8 * 1024 * 1024    # max bf16 weight tile kept VMEM-resident
_VMEM_BUDGET = 24 * 1024 * 1024         # per-grid-step working-set target
_VMEM_LIMIT = 40 * 1024 * 1024          # scoped VMEM limit handed to Mosaic


def _round_up(x, m):
    return (x + m - 1) // m * m


def _liaf_kernel(x_ref, w_ref, b_ref, d_ref, o_ref,
                 xs_ref, syn_ref, state_ref, *, tt_block, b_pad, thresh):
    """One (hidden-tile, time-block) grid step.

    x_ref    : (B_pad, Tt, I_pad) f32   activations, natural (B, T, I) layout
    w_ref    : (I_pad, Ht)        bf16  weight tile (t-invariant)
    b_ref    : (1, Ht)            f32   bias tile
    d_ref    : (1, 1)             f32   sigmoid(decay), SMEM scalar
    o_ref    : (B_pad, Tt, Ht)    f32   output block, natural (B, T, H) layout
    xs_ref   : (B_pad*Tt, I_pad)  bf16  scratch: b-major 2-D matmul LHS
    syn_ref  : (B_pad, Tt, Ht)    f32   scratch: synaptic input for this block
    state_ref: (B_pad, Ht)        f32   carried gated membrane  mem*(1-spike)
    """
    t = pl.program_id(1)

    # 1) Repack the activation block into a dense 2-D bf16 LHS (row = b*Tt+tt).
    #    Leading-dim slices of x_ref are free; the scratch stores are dense.
    for b in range(b_pad):
        xs_ref[b * tt_block:(b + 1) * tt_block, :] = (
            x_ref[b].astype(jnp.bfloat16))

    # 2) One fused MXU matmul covering every timestep of the block
    #    (the nn.Linear applied to all Tt timesteps at once), f32 accumulation.
    syn = jnp.dot(xs_ref[...], w_ref[...], preferred_element_type=jnp.float32)
    syn = syn + b_ref[...]

    # 3) Stash it as (B_pad, Tt, Ht) so the recurrence takes per-timestep
    #    (B_pad, Ht) slices with plain static indexing.
    for b in range(b_pad):
        syn_ref[b] = syn[b * tt_block:(b + 1) * tt_block, :]

    d = d_ref[0, 0]                                   # sigmoid(decay)

    # New time sweep for this hidden tile: reset the carried state, which
    # makes mem_0 = syn_0 exactly.
    @pl.when(t == 0)
    def _():
        state_ref[...] = jnp.zeros_like(state_ref)

    # 4) Sequential membrane recurrence over the block's timesteps.
    #    state == mem_{t-1} * (1 - spike_{t-1});  mem_t = state*d + syn_t.
    state = state_ref[...]
    for tt in range(tt_block):                        # static unroll, tiny live set
        mem = state * d + syn_ref[:, tt, :]
        o_ref[:, tt, :] = jnp.maximum(mem, 0.0)       # analog fire: relu
        state = jnp.where(mem > thresh, 0.0, mem)     # gate by spike
    state_ref[...] = state


def liaf_cell_forward(data_btI, weight_hi, bias_h, decay, *, thresh=THRESH):
    """data_btI: (B, T, I);  weight_hi: (H, I);  bias_h: (H,);  decay: (1,)."""
    B, T, I = data_btI.shape
    H = weight_hi.shape[0]

    B_pad = _round_up(B, 8)
    I_pad = _round_up(I, 128)
    H_pad = _round_up(H, 128)

    # --- hidden tiling: read the activation stream from HBM exactly once ---
    # Single hidden tile whenever the bf16 weight tile fits the budget;
    # otherwise the fewest (multiple-of-128) tiles that do.
    n_lanes = H_pad // 128
    Ht = 128
    for n_tiles in range(1, n_lanes + 1):
        if n_lanes % n_tiles == 0 and \
                I_pad * (H_pad // n_tiles) * 2 <= _WEIGHT_TILE_LIMIT:
            Ht = H_pad // n_tiles
            break

    # --- time blocking: fuse as many timesteps per grid step as VMEM allows --
    def _block_bytes(tt):
        rows = B_pad * tt
        return (2 * rows * I_pad * 4      # x block (f32), double-buffered
                + 2 * I_pad * Ht * 2      # weight tile (bf16), double-buffered
                + 2 * Ht * 4              # bias tile
                + 2 * rows * Ht * 4       # output block (f32), double-buffered
                + rows * I_pad * 2        # bf16 LHS scratch
                + rows * Ht * 4           # syn scratch
                + B_pad * Ht * 4)         # membrane-state carry

    Tt = min(_round_up(T, 8), _MAX_TT)
    while Tt > 8 and _block_bytes(Tt) > _VMEM_BUDGET:
        Tt -= 8
    T_pad = _round_up(T, Tt)

    # --- operands: no transpose; padding is a no-op for aligned shapes -------
    x = data_btI.astype(jnp.float32)
    if (B_pad, T_pad, I_pad) != (B, T, I):
        x = jnp.pad(x, ((0, B_pad - B), (0, T_pad - T), (0, I_pad - I)))

    # Weight/bias are small; in a real model this prep would be done once.
    w = jnp.zeros((I_pad, H_pad), jnp.bfloat16)
    w = w.at[:I, :H].set(jnp.transpose(weight_hi).astype(jnp.bfloat16))

    b = jnp.zeros((1, H_pad), jnp.float32)
    b = b.at[0, :H].set(bias_h.astype(jnp.float32))

    # norm_decay(decay) = sigmoid(decay), hoisted out of the kernel.
    d = jax.nn.sigmoid(decay.astype(jnp.float32)).reshape(1, 1)

    rows = B_pad * Tt
    grid = (H_pad // Ht, T_pad // Tt)               # (hidden tiles, time)

    kernel = functools.partial(_liaf_kernel, tt_block=Tt, b_pad=B_pad,
                               thresh=thresh)

    out = pl.pallas_call(
        kernel,
        out_shape=jax.ShapeDtypeStruct((B_pad, T_pad, H_pad), jnp.float32),
        grid_spec=pltpu.PrefetchScalarGridSpec(
            num_scalar_prefetch=0,
            grid=grid,
            in_specs=[
                # activations, natural (B, T, I) layout, one time block each
                pl.BlockSpec((B_pad, Tt, I_pad), lambda h, t: (0, t, 0)),
                # t-invariant weight / bias tiles (re-fetched only when h moves)
                pl.BlockSpec((I_pad, Ht), lambda h, t: (0, h)),
                pl.BlockSpec((1, Ht), lambda h, t: (0, h)),
                # precomputed sigmoid(decay) scalar in SMEM
                pl.BlockSpec(memory_space=pltpu.MemorySpace.SMEM),
            ],
            out_specs=pl.BlockSpec((B_pad, Tt, Ht), lambda h, t: (0, t, h)),
            scratch_shapes=[
                pltpu.VMEM((rows, I_pad), jnp.bfloat16),   # 2-D matmul LHS
                pltpu.VMEM((B_pad, Tt, Ht), jnp.float32),  # synaptic input
                pltpu.VMEM((B_pad, Ht), jnp.float32),      # gated-membrane carry
            ],
        ),
        compiler_params=pltpu.CompilerParams(
            dimension_semantics=("parallel", "arbitrary"),
            vmem_limit_bytes=_VMEM_LIMIT,
        ),
    )(x, w, b, d)

    # Output is already in (B, T, H) order; just drop the padding.
    return out[:B, :T, :H]


def liaf_cell_reference(data_btI, weight_hi, bias_h, decay, thresh=THRESH):
    """Pure-JAX reference mirroring the PyTorch forward (bf16 Linear inputs)."""
    B, T, I = data_btI.shape
    H = weight_hi.shape[0]
    x = data_btI.astype(jnp.bfloat16).astype(jnp.float32)
    w = weight_hi.astype(jnp.bfloat16).astype(jnp.float32)
    syn = jnp.einsum("bti,hi->bth", x, w,
                     precision=jax.lax.Precision.HIGHEST) + bias_h
    d = jax.nn.sigmoid(decay.astype(jnp.float32))[0]
    mem = syn[:, 0, :]
    spike = jnp.zeros((B, H), jnp.float32)
    outs = []
    for t in range(T):
        if t >= 1:
            mem = mem * d * (1.0 - spike) + syn[:, t, :]
        spike = (mem > thresh).astype(jnp.float32)
        outs.append(jnp.maximum(mem, 0.0))
    return jnp.stack(outs, axis=1)


if __name__ == "__main__":
    # Small shapes consistent with the module's (Batch, Time, inputSize) input.
    B, T, I, H = 4, 8, 16, 32

    key = jax.random.PRNGKey(0)
    k_data, k_w, k_b = jax.random.split(key, 3)

    data = jax.random.normal(k_data, (B, T, I), dtype=jnp.float32)

    # nn.Linear(inputSize, hiddenSize) init: U(-1/sqrt(I), 1/sqrt(I)).
    bound = 1.0 / (I ** 0.5)
    weight = jax.random.uniform(k_w, (H, I), minval=-bound, maxval=bound,
                                dtype=jnp.float32)
    bias = jax.random.uniform(k_b, (H,), minval=-bound, maxval=bound,
                              dtype=jnp.float32)
    decay = jnp.ones((1,), jnp.float32) * 0.5   # torch.nn.Parameter(ones(1)*0.5)

    out = liaf_cell_forward(data, weight, bias, decay)
    out = jax.block_until_ready(out)

    ref = liaf_cell_reference(data, weight, bias, decay)
    assert out.shape == (B, T, H)
    max_err = float(jnp.max(jnp.abs(out - ref)))
    assert jnp.allclose(out, ref, atol=2e-3, rtol=2e-3), f"max err {max_err}"

    print("KERNEL_OK")
</pallas_src>

<mosaic_0001>
module attributes {stable_mosaic.version = 11 : i64} {
  func.func @_liaf_kernel(%arg0: i32, %arg1: i32, %arg2: memref<8x8x128xf32, #tpu.memory_space<vmem>>, %arg3: memref<128x128xbf16, #tpu.memory_space<vmem>>, %arg4: memref<1x128xf32, #tpu.memory_space<vmem>>, %arg5: memref<1x1xf32, #tpu.memory_space<smem>>, %arg6: memref<8x8x128xf32, #tpu.memory_space<vmem>>, %arg7: memref<64x128xbf16, #tpu.memory_space<vmem>>, %arg8: memref<8x8x128xf32, #tpu.memory_space<vmem>>, %arg9: memref<8x128xf32, #tpu.memory_space<vmem>>) attributes {dimension_semantics = [#tpu.dimension_semantics<parallel>, #tpu.dimension_semantics<arbitrary>], iteration_bounds = array<i64: 1, 1>, scalar_prefetch = 0 : i64, scratch_operands = 3 : i64, tpu.core_type = #tpu.core_type<tc>, window_params = [{transform_indices = @transform_0, window_bounds = array<i64: 8, 8, 128>}, {transform_indices = @transform_1, window_bounds = array<i64: 128, 128>}, {transform_indices = @transform_2, window_bounds = array<i64: 1, 128>}, {transform_indices = @transform_3, window_bounds = array<i64: 1, 1>}, {transform_indices = @transform_4, window_bounds = array<i64: 8, 8, 128>}]} {
    %c0 = arith.constant 0 : index
    %c0_0 = arith.constant 0 : index
    %c0_1 = arith.constant 0 : index
    %0 = vector.load %arg2[%c0, %c0_0, %c0_1] : memref<8x8x128xf32, #tpu.memory_space<vmem>>, vector<1x8x128xf32>
    %1 = vector.shape_cast %0 : vector<1x8x128xf32> to vector<8x128xf32>
    %2 = arith.truncf %1 : vector<8x128xf32> to vector<8x128xbf16>
    %c0_2 = arith.constant 0 : index
    %c0_3 = arith.constant 0 : index
    %3 = vector.load %arg7[%c0_2, %c0_3] : memref<64x128xbf16, #tpu.memory_space<vmem>>, vector<8x128xbf16>
    tpu.vector_store %arg7[%c0_2, %c0_3], %2 {strides = array<i32>} : memref<64x128xbf16, #tpu.memory_space<vmem>>, vector<8x128xbf16>,
    %c1 = arith.constant 1 : index
    %c0_4 = arith.constant 0 : index
    %c0_5 = arith.constant 0 : index
    %4 = vector.load %arg2[%c1, %c0_4, %c0_5] : memref<8x8x128xf32, #tpu.memory_space<vmem>>, vector<1x8x128xf32>
    %5 = vector.shape_cast %4 : vector<1x8x128xf32> to vector<8x128xf32>
    %6 = arith.truncf %5 : vector<8x128xf32> to vector<8x128xbf16>
    %c8 = arith.constant 8 : index
    %c0_6 = arith.constant 0 : index
    %7 = vector.load %arg7[%c8, %c0_6] : memref<64x128xbf16, #tpu.memory_space<vmem>>, vector<8x128xbf16>
    tpu.vector_store %arg7[%c8, %c0_6], %6 {strides = array<i32>} : memref<64x128xbf16, #tpu.memory_space<vmem>>, vector<8x128xbf16>,
    %c2 = arith.constant 2 : index
    %c0_7 = arith.constant 0 : index
    %c0_8 = arith.constant 0 : index
    %8 = vector.load %arg2[%c2, %c0_7, %c0_8] : memref<8x8x128xf32, #tpu.memory_space<vmem>>, vector<1x8x128xf32>
    %9 = vector.shape_cast %8 : vector<1x8x128xf32> to vector<8x128xf32>
    %10 = arith.truncf %9 : vector<8x128xf32> to vector<8x128xbf16>
    %c16 = arith.constant 16 : index
    %c0_9 = arith.constant 0 : index
    %11 = vector.load %arg7[%c16, %c0_9] : memref<64x128xbf16, #tpu.memory_space<vmem>>, vector<8x128xbf16>
    tpu.vector_store %arg7[%c16, %c0_9], %10 {strides = array<i32>} : memref<64x128xbf16, #tpu.memory_space<vmem>>, vector<8x128xbf16>,
    %c3 = arith.constant 3 : index
    %c0_10 = arith.constant 0 : index
    %c0_11 = arith.constant 0 : index
    %12 = vector.load %arg2[%c3, %c0_10, %c0_11] : memref<8x8x128xf32, #tpu.memory_space<vmem>>, vector<1x8x128xf32>
    %13 = vector.shape_cast %12 : vector<1x8x128xf32> to vector<8x128xf32>
    %14 = arith.truncf %13 : vector<8x128xf32> to vector<8x128xbf16>
    %c24 = arith.constant 24 : index
    %c0_12 = arith.constant 0 : index
    %15 = vector.load %arg7[%c24, %c0_12] : memref<64x128xbf16, #tpu.memory_space<vmem>>, vector<8x128xbf16>
    tpu.vector_store %arg7[%c24, %c0_12], %14 {strides = array<i32>} : memref<64x128xbf16, #tpu.memory_space<vmem>>, vector<8x128xbf16>,
    %c4 = arith.constant 4 : index
    %c0_13 = arith.constant 0 : index
    %c0_14 = arith.constant 0 : index
    %16 = vector.load %arg2[%c4, %c0_13, %c0_14] : memref<8x8x128xf32, #tpu.memory_space<vmem>>, vector<1x8x128xf32>
    %17 = vector.shape_cast %16 : vector<1x8x128xf32> to vector<8x128xf32>
    %18 = arith.truncf %17 : vector<8x128xf32> to vector<8x128xbf16>
    %c32 = arith.constant 32 : index
    %c0_15 = arith.constant 0 : index
    %19 = vector.load %arg7[%c32, %c0_15] : memref<64x128xbf16, #tpu.memory_space<vmem>>, vector<8x128xbf16>
    tpu.vector_store %arg7[%c32, %c0_15], %18 {strides = array<i32>} : memref<64x128xbf16, #tpu.memory_space<vmem>>, vector<8x128xbf16>,
    %c5 = arith.constant 5 : index
    %c0_16 = arith.constant 0 : index
    %c0_17 = arith.constant 0 : index
    %20 = vector.load %arg2[%c5, %c0_16, %c0_17] : memref<8x8x128xf32, #tpu.memory_space<vmem>>, vector<1x8x128xf32>
    %21 = vector.shape_cast %20 : vector<1x8x128xf32> to vector<8x128xf32>
    %22 = arith.truncf %21 : vector<8x128xf32> to vector<8x128xbf16>
    %c40 = arith.constant 40 : index
    %c0_18 = arith.constant 0 : index
    %23 = vector.load %arg7[%c40, %c0_18] : memref<64x128xbf16, #tpu.memory_space<vmem>>, vector<8x128xbf16>
    tpu.vector_store %arg7[%c40, %c0_18], %22 {strides = array<i32>} : memref<64x128xbf16, #tpu.memory_space<vmem>>, vector<8x128xbf16>,
    %c6 = arith.constant 6 : index
    %c0_19 = arith.constant 0 : index
    %c0_20 = arith.constant 0 : index
    %24 = vector.load %arg2[%c6, %c0_19, %c0_20] : memref<8x8x128xf32, #tpu.memory_space<vmem>>, vector<1x8x128xf32>
    %25 = vector.shape_cast %24 : vector<1x8x128xf32> to vector<8x128xf32>
    %26 = arith.truncf %25 : vector<8x128xf32> to vector<8x128xbf16>
    %c48 = arith.constant 48 : index
    %c0_21 = arith.constant 0 : index
    %27 = vector.load %arg7[%c48, %c0_21] : memref<64x128xbf16, #tpu.memory_space<vmem>>, vector<8x128xbf16>
    tpu.vector_store %arg7[%c48, %c0_21], %26 {strides = array<i32>} : memref<64x128xbf16, #tpu.memory_space<vmem>>, vector<8x128xbf16>,
    %c7 = arith.constant 7 : index
    %c0_22 = arith.constant 0 : index
    %c0_23 = arith.constant 0 : index
    %28 = vector.load %arg2[%c7, %c0_22, %c0_23] : memref<8x8x128xf32, #tpu.memory_space<vmem>>, vector<1x8x128xf32>
    %29 = vector.shape_cast %28 : vector<1x8x128xf32> to vector<8x128xf32>
    %30 = arith.truncf %29 : vector<8x128xf32> to vector<8x128xbf16>
    %c56 = arith.constant 56 : index
    %c0_24 = arith.constant 0 : index
    %31 = vector.load %arg7[%c56, %c0_24] : memref<64x128xbf16, #tpu.memory_space<vmem>>, vector<8x128xbf16>
    tpu.vector_store %arg7[%c56, %c0_24], %30 {strides = array<i32>} : memref<64x128xbf16, #tpu.memory_space<vmem>>, vector<8x128xbf16>,
    %c0_25 = arith.constant 0 : index
    %c0_26 = arith.constant 0 : index
    %32 = vector.load %arg7[%c0_25, %c0_26] : memref<64x128xbf16, #tpu.memory_space<vmem>>, vector<64x128xbf16>
    %c0_27 = arith.constant 0 : index
    %c0_28 = arith.constant 0 : index
    %33 = vector.load %arg3[%c0_27, %c0_28] : memref<128x128xbf16, #tpu.memory_space<vmem>>, vector<128x128xbf16>
    %cst = arith.constant dense<0.000000e+00> : vector<64x128xf32>
    %34 = tpu.matmul %32, %33, %cst {dimension_numbers = #tpu.dot_dimension_numbers<[1], [0], [0], [1], [0, 0, 1, 1], [], []>} : vector<64x128xbf16>, vector<128x128xbf16>, vector<64x128xf32> -> vector<64x128xf32>
    %c0_29 = arith.constant 0 : index
    %c0_30 = arith.constant 0 : index
    %35 = vector.load %arg4[%c0_29, %c0_30] : memref<1x128xf32, #tpu.memory_space<vmem>>, vector<1x128xf32>
    %36 = vector.broadcast %35 : vector<1x128xf32> to vector<64x128xf32>
    %37 = arith.addf %34, %36 : vector<64x128xf32>
    %38 = vector.extract_strided_slice %37 {offsets = [0, 0], sizes = [8, 128], strides = [1, 1]} : vector<64x128xf32> to vector<8x128xf32>
    %c0_31 = arith.constant 0 : index
    %c0_32 = arith.constant 0 : index
    %c0_33 = arith.constant 0 : index
    %39 = vector.load %arg8[%c0_31, %c0_32, %c0_33] : memref<8x8x128xf32, #tpu.memory_space<vmem>>, vector<1x8x128xf32>
    %40 = vector.shape_cast %39 : vector<1x8x128xf32> to vector<8x128xf32>
    %41 = vector.shape_cast %38 : vector<8x128xf32> to vector<1x8x128xf32>
    tpu.vector_store %arg8[%c0_31, %c0_32, %c0_33], %41 {strides = array<i32>} : memref<8x8x128xf32, #tpu.memory_space<vmem>>, vector<1x8x128xf32>,
    %42 = vector.extract_strided_slice %37 {offsets = [8, 0], sizes = [8, 128], strides = [1, 1]} : vector<64x128xf32> to vector<8x128xf32>
    %c1_34 = arith.constant 1 : index
    %c0_35 = arith.constant 0 : index
    %c0_36 = arith.constant 0 : index
    %43 = vector.load %arg8[%c1_34, %c0_35, %c0_36] : memref<8x8x128xf32, #tpu.memory_space<vmem>>, vector<1x8x128xf32>
    %44 = vector.shape_cast %43 : vector<1x8x128xf32> to vector<8x128xf32>
    %45 = vector.shape_cast %42 : vector<8x128xf32> to vector<1x8x128xf32>
    tpu.vector_store %arg8[%c1_34, %c0_35, %c0_36], %45 {strides = array<i32>} : memref<8x8x128xf32, #tpu.memory_space<vmem>>, vector<1x8x128xf32>,
    %46 = vector.extract_strided_slice %37 {offsets = [16, 0], sizes = [8, 128], strides = [1, 1]} : vector<64x128xf32> to vector<8x128xf32>
    %c2_37 = arith.constant 2 : index
    %c0_38 = arith.constant 0 : index
    %c0_39 = arith.constant 0 : index
    %47 = vector.load %arg8[%c2_37, %c0_38, %c0_39] : memref<8x8x128xf32, #tpu.memory_space<vmem>>, vector<1x8x128xf32>
    %48 = vector.shape_cast %47 : vector<1x8x128xf32> to vector<8x128xf32>
    %49 = vector.shape_cast %46 : vector<8x128xf32> to vector<1x8x128xf32>
    tpu.vector_store %arg8[%c2_37, %c0_38, %c0_39], %49 {strides = array<i32>} : memref<8x8x128xf32, #tpu.memory_space<vmem>>, vector<1x8x128xf32>,
    %50 = vector.extract_strided_slice %37 {offsets = [24, 0], sizes = [8, 128], strides = [1, 1]} : vector<64x128xf32> to vector<8x128xf32>
    %c3_40 = arith.constant 3 : index
    %c0_41 = arith.constant 0 : index
    %c0_42 = arith.constant 0 : index
    %51 = vector.load %arg8[%c3_40, %c0_41, %c0_42] : memref<8x8x128xf32, #tpu.memory_space<vmem>>, vector<1x8x128xf32>
    %52 = vector.shape_cast %51 : vector<1x8x128xf32> to vector<8x128xf32>
    %53 = vector.shape_cast %50 : vector<8x128xf32> to vector<1x8x128xf32>
    tpu.vector_store %arg8[%c3_40, %c0_41, %c0_42], %53 {strides = array<i32>} : memref<8x8x128xf32, #tpu.memory_space<vmem>>, vector<1x8x128xf32>,
    %54 = vector.extract_strided_slice %37 {offsets = [32, 0], sizes = [8, 128], strides = [1, 1]} : vector<64x128xf32> to vector<8x128xf32>
    %c4_43 = arith.constant 4 : index
    %c0_44 = arith.constant 0 : index
    %c0_45 = arith.constant 0 : index
    %55 = vector.load %arg8[%c4_43, %c0_44, %c0_45] : memref<8x8x128xf32, #tpu.memory_space<vmem>>, vector<1x8x128xf32>
    %56 = vector.shape_cast %55 : vector<1x8x128xf32> to vector<8x128xf32>
    %57 = vector.shape_cast %54 : vector<8x128xf32> to vector<1x8x128xf32>
    tpu.vector_store %arg8[%c4_43, %c0_44, %c0_45], %57 {strides = array<i32>} : memref<8x8x128xf32, #tpu.memory_space<vmem>>, vector<1x8x128xf32>,
    %58 = vector.extract_strided_slice %37 {offsets = [40, 0], sizes = [8, 128], strides = [1, 1]} : vector<64x128xf32> to vector<8x128xf32>
    %c5_46 = arith.constant 5 : index
    %c0_47 = arith.constant 0 : index
    %c0_48 = arith.constant 0 : index
    %59 = vector.load %arg8[%c5_46, %c0_47, %c0_48] : memref<8x8x128xf32, #tpu.memory_space<vmem>>, vector<1x8x128xf32>
    %60 = vector.shape_cast %59 : vector<1x8x128xf32> to vector<8x128xf32>
    %61 = vector.shape_cast %58 : vector<8x128xf32> to vector<1x8x128xf32>
    tpu.vector_store %arg8[%c5_46, %c0_47, %c0_48], %61 {strides = array<i32>} : memref<8x8x128xf32, #tpu.memory_space<vmem>>, vector<1x8x128xf32>,
    %62 = vector.extract_strided_slice %37 {offsets = [48, 0], sizes = [8, 128], strides = [1, 1]} : vector<64x128xf32> to vector<8x128xf32>
    %c6_49 = arith.constant 6 : index
    %c0_50 = arith.constant 0 : index
    %c0_51 = arith.constant 0 : index
    %63 = vector.load %arg8[%c6_49, %c0_50, %c0_51] : memref<8x8x128xf32, #tpu.memory_space<vmem>>, vector<1x8x128xf32>
    %64 = vector.shape_cast %63 : vector<1x8x128xf32> to vector<8x128xf32>
    %65 = vector.shape_cast %62 : vector<8x128xf32> to vector<1x8x128xf32>
    tpu.vector_store %arg8[%c6_49, %c0_50, %c0_51], %65 {strides = array<i32>} : memref<8x8x128xf32, #tpu.memory_space<vmem>>, vector<1x8x128xf32>,
    %66 = vector.extract_strided_slice %37 {offsets = [56, 0], sizes = [8, 128], strides = [1, 1]} : vector<64x128xf32> to vector<8x128xf32>
    %c7_52 = arith.constant 7 : index
    %c0_53 = arith.constant 0 : index
    %c0_54 = arith.constant 0 : index
    %67 = vector.load %arg8[%c7_52, %c0_53, %c0_54] : memref<8x8x128xf32, #tpu.memory_space<vmem>>, vector<1x8x128xf32>
    %68 = vector.shape_cast %67 : vector<1x8x128xf32> to vector<8x128xf32>
    %69 = vector.shape_cast %66 : vector<8x128xf32> to vector<1x8x128xf32>
    tpu.vector_store %arg8[%c7_52, %c0_53, %c0_54], %69 {strides = array<i32>} : memref<8x8x128xf32, #tpu.memory_space<vmem>>, vector<1x8x128xf32>,
    %c0_55 = arith.constant 0 : index
    %c0_56 = arith.constant 0 : index
    %70 = memref.load %arg5[%c0_55, %c0_56] : memref<1x1xf32, #tpu.memory_space<smem>>
    %c0_i32 = arith.constant 0 : i32
    %71 = arith.cmpi eq, %arg1, %c0_i32 : i32
    %72 = arith.extui %71 : i1 to i32
    %c0_i32_57 = arith.constant 0 : i32
    %73 = arith.cmpi ne, %72, %c0_i32_57 : i32
    scf.if %73 {
      %cst_134 = arith.constant 0.000000e+00 : f32
      %188 = vector.broadcast %cst_134 : f32 to vector<8x128xf32>
      %c0_135 = arith.constant 0 : index
      %c0_136 = arith.constant 0 : index
      %189 = vector.load %arg9[%c0_135, %c0_136] : memref<8x128xf32, #tpu.memory_space<vmem>>, vector<8x128xf32>
      tpu.vector_store %arg9[%c0_135, %c0_136], %188 {strides = array<i32>} : memref<8x128xf32, #tpu.memory_space<vmem>>, vector<8x128xf32>,
    } else {
    }
    %c0_58 = arith.constant 0 : index
    %c0_59 = arith.constant 0 : index
    %74 = vector.load %arg9[%c0_58, %c0_59] : memref<8x128xf32, #tpu.memory_space<vmem>>, vector<8x128xf32>
    %75 = vector.broadcast %70 : f32 to vector<8x128xf32>
    %76 = arith.mulf %74, %75 : vector<8x128xf32>
    %c0_60 = arith.constant 0 : index
    %c0_61 = arith.constant 0 : index
    %c0_62 = arith.constant 0 : index
    %77 = vector.load %arg8[%c0_60, %c0_61, %c0_62] : memref<8x8x128xf32, #tpu.memory_space<vmem>>, vector<8x1x128xf32>
    %78 = vector.shape_cast %77 : vector<8x1x128xf32> to vector<8x128xf32>
    %79 = arith.addf %76, %78 : vector<8x128xf32>
    %cst_63 = arith.constant 0.000000e+00 : f32
    %80 = vector.broadcast %cst_63 : f32 to vector<8x128xf32>
    %81 = arith.maximumf %79, %80 : vector<8x128xf32>
    %c0_64 = arith.constant 0 : index
    %c0_65 = arith.constant 0 : index
    %c0_66 = arith.constant 0 : index
    %82 = vector.load %arg6[%c0_64, %c0_65, %c0_66] : memref<8x8x128xf32, #tpu.memory_space<vmem>>, vector<8x1x128xf32>
    %83 = vector.shape_cast %82 : vector<8x1x128xf32> to vector<8x128xf32>
    %84 = vector.shape_cast %81 : vector<8x128xf32> to vector<8x1x128xf32>
    tpu.vector_store %arg6[%c0_64, %c0_65, %c0_66], %84 {strides = array<i32>} : memref<8x8x128xf32, #tpu.memory_space<vmem>>, vector<8x1x128xf32>,
    %cst_67 = arith.constant 5.000000e-01 : f32
    %85 = vector.broadcast %cst_67 : f32 to vector<8x128xf32>
    %86 = arith.cmpf ogt, %79, %85 : vector<8x128xf32>
    %cst_68 = arith.constant 0.000000e+00 : f32
    %87 = vector.broadcast %cst_68 : f32 to vector<8x128xf32>
    %88 = arith.select %86, %87, %79 : vector<8x128xi1>, vector<8x128xf32>
    %89 = vector.broadcast %70 : f32 to vector<8x128xf32>
    %90 = arith.mulf %88, %89 : vector<8x128xf32>
    %c0_69 = arith.constant 0 : index
    %c1_70 = arith.constant 1 : index
    %c0_71 = arith.constant 0 : index
    %91 = vector.load %arg8[%c0_69, %c1_70, %c0_71] : memref<8x8x128xf32, #tpu.memory_space<vmem>>, vector<8x1x128xf32>
    %92 = vector.shape_cast %91 : vector<8x1x128xf32> to vector<8x128xf32>
    %93 = arith.addf %90, %92 : vector<8x128xf32>
    %cst_72 = arith.constant 0.000000e+00 : f32
    %94 = vector.broadcast %cst_72 : f32 to vector<8x128xf32>
    %95 = arith.maximumf %93, %94 : vector<8x128xf32>
    %c0_73 = arith.constant 0 : index
    %c1_74 = arith.constant 1 : index
    %c0_75 = arith.constant 0 : index
    %96 = vector.load %arg6[%c0_73, %c1_74, %c0_75] : memref<8x8x128xf32, #tpu.memory_space<vmem>>, vector<8x1x128xf32>
    %97 = vector.shape_cast %96 : vector<8x1x128xf32> to vector<8x128xf32>
    %98 = vector.shape_cast %95 : vector<8x128xf32> to vector<8x1x128xf32>
    tpu.vector_store %arg6[%c0_73, %c1_74, %c0_75], %98 {strides = array<i32>} : memref<8x8x128xf32, #tpu.memory_space<vmem>>, vector<8x1x128xf32>,
    %cst_76 = arith.constant 5.000000e-01 : f32
    %99 = vector.broadcast %cst_76 : f32 to vector<8x128xf32>
    %100 = arith.cmpf ogt, %93, %99 : vector<8x128xf32>
    %cst_77 = arith.constant 0.000000e+00 : f32
    %101 = vector.broadcast %cst_77 : f32 to vector<8x128xf32>
    %102 = arith.select %100, %101, %93 : vector<8x128xi1>, vector<8x128xf32>
    %103 = vector.broadcast %70 : f32 to vector<8x128xf32>
    %104 = arith.mulf %102, %103 : vector<8x128xf32>
    %c0_78 = arith.constant 0 : index
    %c2_79 = arith.constant 2 : index
    %c0_80 = arith.constant 0 : index
    %105 = vector.load %arg8[%c0_78, %c2_79, %c0_80] : memref<8x8x128xf32, #tpu.memory_space<vmem>>, vector<8x1x128xf32>
    %106 = vector.shape_cast %105 : vector<8x1x128xf32> to vector<8x128xf32>
    %107 = arith.addf %104, %106 : vector<8x128xf32>
    %cst_81 = arith.constant 0.000000e+00 : f32
    %108 = vector.broadcast %cst_81 : f32 to vector<8x128xf32>
    %109 = arith.maximumf %107, %108 : vector<8x128xf32>
    %c0_82 = arith.constant 0 : index
    %c2_83 = arith.constant 2 : index
    %c0_84 = arith.constant 0 : index
    %110 = vector.load %arg6[%c0_82, %c2_83, %c0_84] : memref<8x8x128xf32, #tpu.memory_space<vmem>>, vector<8x1x128xf32>
    %111 = vector.shape_cast %110 : vector<8x1x128xf32> to vector<8x128xf32>
    %112 = vector.shape_cast %109 : vector<8x128xf32> to vector<8x1x128xf32>
    tpu.vector_store %arg6[%c0_82, %c2_83, %c0_84], %112 {strides = array<i32>} : memref<8x8x128xf32, #tpu.memory_space<vmem>>, vector<8x1x128xf32>,
    %cst_85 = arith.constant 5.000000e-01 : f32
    %113 = vector.broadcast %cst_85 : f32 to vector<8x128xf32>
    %114 = arith.cmpf ogt, %107, %113 : vector<8x128xf32>
    %cst_86 = arith.constant 0.000000e+00 : f32
    %115 = vector.broadcast %cst_86 : f32 to vector<8x128xf32>
    %116 = arith.select %114, %115, %107 : vector<8x128xi1>, vector<8x128xf32>
    %117 = vector.broadcast %70 : f32 to vector<8x128xf32>
    %118 = arith.mulf %116, %117 : vector<8x128xf32>
    %c0_87 = arith.constant 0 : index
    %c3_88 = arith.constant 3 : index
    %c0_89 = arith.constant 0 : index
    %119 = vector.load %arg8[%c0_87, %c3_88, %c0_89] : memref<8x8x128xf32, #tpu.memory_space<vmem>>, vector<8x1x128xf32>
    %120 = vector.shape_cast %119 : vector<8x1x128xf32> to vector<8x128xf32>
    %121 = arith.addf %118, %120 : vector<8x128xf32>
    %cst_90 = arith.constant 0.000000e+00 : f32
    %122 = vector.broadcast %cst_90 : f32 to vector<8x128xf32>
    %123 = arith.maximumf %121, %122 : vector<8x128xf32>
    %c0_91 = arith.constant 0 : index
    %c3_92 = arith.constant 3 : index
    %c0_93 = arith.constant 0 : index
    %124 = vector.load %arg6[%c0_91, %c3_92, %c0_93] : memref<8x8x128xf32, #tpu.memory_space<vmem>>, vector<8x1x128xf32>
    %125 = vector.shape_cast %124 : vector<8x1x128xf32> to vector<8x128xf32>
    %126 = vector.shape_cast %123 : vector<8x128xf32> to vector<8x1x128xf32>
    tpu.vector_store %arg6[%c0_91, %c3_92, %c0_93], %126 {strides = array<i32>} : memref<8x8x128xf32, #tpu.memory_space<vmem>>, vector<8x1x128xf32>,
    %cst_94 = arith.constant 5.000000e-01 : f32
    %127 = vector.broadcast %cst_94 : f32 to vector<8x128xf32>
    %128 = arith.cmpf ogt, %121, %127 : vector<8x128xf32>
    %cst_95 = arith.constant 0.000000e+00 : f32
    %129 = vector.broadcast %cst_95 : f32 to vector<8x128xf32>
    %130 = arith.select %128, %129, %121 : vector<8x128xi1>, vector<8x128xf32>
    %131 = vector.broadcast %70 : f32 to vector<8x128xf32>
    %132 = arith.mulf %130, %131 : vector<8x128xf32>
    %c0_96 = arith.constant 0 : index
    %c4_97 = arith.constant 4 : index
    %c0_98 = arith.constant 0 : index
    %133 = vector.load %arg8[%c0_96, %c4_97, %c0_98] : memref<8x8x128xf32, #tpu.memory_space<vmem>>, vector<8x1x128xf32>
    %134 = vector.shape_cast %133 : vector<8x1x128xf32> to vector<8x128xf32>
    %135 = arith.addf %132, %134 : vector<8x128xf32>
    %cst_99 = arith.constant 0.000000e+00 : f32
    %136 = vector.broadcast %cst_99 : f32 to vector<8x128xf32>
    %137 = arith.maximumf %135, %136 : vector<8x128xf32>
    %c0_100 = arith.constant 0 : index
    %c4_101 = arith.constant 4 : index
    %c0_102 = arith.constant 0 : index
    %138 = vector.load %arg6[%c0_100, %c4_101, %c0_102] : memref<8x8x128xf32, #tpu.memory_space<vmem>>, vector<8x1x128xf32>
    %139 = vector.shape_cast %138 : vector<8x1x128xf32> to vector<8x128xf32>
    %140 = vector.shape_cast %137 : vector<8x128xf32> to vector<8x1x128xf32>
    tpu.vector_store %arg6[%c0_100, %c4_101, %c0_102], %140 {strides = array<i32>} : memref<8x8x128xf32, #tpu.memory_space<vmem>>, vector<8x1x128xf32>,
    %cst_103 = arith.constant 5.000000e-01 : f32
    %141 = vector.broadcast %cst_103 : f32 to vector<8x128xf32>
    %142 = arith.cmpf ogt, %135, %141 : vector<8x128xf32>
    %cst_104 = arith.constant 0.000000e+00 : f32
    %143 = vector.broadcast %cst_104 : f32 to vector<8x128xf32>
    %144 = arith.select %142, %143, %135 : vector<8x128xi1>, vector<8x128xf32>
    %145 = vector.broadcast %70 : f32 to vector<8x128xf32>
    %146 = arith.mulf %144, %145 : vector<8x128xf32>
    %c0_105 = arith.constant 0 : index
    %c5_106 = arith.constant 5 : index
    %c0_107 = arith.constant 0 : index
    %147 = vector.load %arg8[%c0_105, %c5_106, %c0_107] : memref<8x8x128xf32, #tpu.memory_space<vmem>>, vector<8x1x128xf32>
    %148 = vector.shape_cast %147 : vector<8x1x128xf32> to vector<8x128xf32>
    %149 = arith.addf %146, %148 : vector<8x128xf32>
    %cst_108 = arith.constant 0.000000e+00 : f32
    %150 = vector.broadcast %cst_108 : f32 to vector<8x128xf32>
    %151 = arith.maximumf %149, %150 : vector<8x128xf32>
    %c0_109 = arith.constant 0 : index
    %c5_110 = arith.constant 5 : index
    %c0_111 = arith.constant 0 : index
    %152 = vector.load %arg6[%c0_109, %c5_110, %c0_111] : memref<8x8x128xf32, #tpu.memory_space<vmem>>, vector<8x1x128xf32>
    %153 = vector.shape_cast %152 : vector<8x1x128xf32> to vector<8x128xf32>
    %154 = vector.shape_cast %151 : vector<8x128xf32> to vector<8x1x128xf32>
    tpu.vector_store %arg6[%c0_109, %c5_110, %c0_111], %154 {strides = array<i32>} : memref<8x8x128xf32, #tpu.memory_space<vmem>>, vector<8x1x128xf32>,
    %cst_112 = arith.constant 5.000000e-01 : f32
    %155 = vector.broadcast %cst_112 : f32 to vector<8x128xf32>
    %156 = arith.cmpf ogt, %149, %155 : vector<8x128xf32>
    %cst_113 = arith.constant 0.000000e+00 : f32
    %157 = vector.broadcast %cst_113 : f32 to vector<8x128xf32>
    %158 = arith.select %156, %157, %149 : vector<8x128xi1>, vector<8x128xf32>
    %159 = vector.broadcast %70 : f32 to vector<8x128xf32>
    %160 = arith.mulf %158, %159 : vector<8x128xf32>
    %c0_114 = arith.constant 0 : index
    %c6_115 = arith.constant 6 : index
    %c0_116 = arith.constant 0 : index
    %161 = vector.load %arg8[%c0_114, %c6_115, %c0_116] : memref<8x8x128xf32, #tpu.memory_space<vmem>>, vector<8x1x128xf32>
    %162 = vector.shape_cast %161 : vector<8x1x128xf32> to vector<8x128xf32>
    %163 = arith.addf %160, %162 : vector<8x128xf32>
    %cst_117 = arith.constant 0.000000e+00 : f32
    %164 = vector.broadcast %cst_117 : f32 to vector<8x128xf32>
    %165 = arith.maximumf %163, %164 : vector<8x128xf32>
    %c0_118 = arith.constant 0 : index
    %c6_119 = arith.constant 6 : index
    %c0_120 = arith.constant 0 : index
    %166 = vector.load %arg6[%c0_118, %c6_119, %c0_120] : memref<8x8x128xf32, #tpu.memory_space<vmem>>, vector<8x1x128xf32>
    %167 = vector.shape_cast %166 : vector<8x1x128xf32> to vector<8x128xf32>
    %168 = vector.shape_cast %165 : vector<8x128xf32> to vector<8x1x128xf32>
    tpu.vector_store %arg6[%c0_118, %c6_119, %c0_120], %168 {strides = array<i32>} : memref<8x8x128xf32, #tpu.memory_space<vmem>>, vector<8x1x128xf32>,
    %cst_121 = arith.constant 5.000000e-01 : f32
    %169 = vector.broadcast %cst_121 : f32 to vector<8x128xf32>
    %170 = arith.cmpf ogt, %163, %169 : vector<8x128xf32>
    %cst_122 = arith.constant 0.000000e+00 : f32
    %171 = vector.broadcast %cst_122 : f32 to vector<8x128xf32>
    %172 = arith.select %170, %171, %163 : vector<8x128xi1>, vector<8x128xf32>
    %173 = vector.broadcast %70 : f32 to vector<8x128xf32>
    %174 = arith.mulf %172, %173 : vector<8x128xf32>
    %c0_123 = arith.constant 0 : index
    %c7_124 = arith.constant 7 : index
    %c0_125 = arith.constant 0 : index
    %175 = vector.load %arg8[%c0_123, %c7_124, %c0_125] : memref<8x8x128xf32, #tpu.memory_space<vmem>>, vector<8x1x128xf32>
    %176 = vector.shape_cast %175 : vector<8x1x128xf32> to vector<8x128xf32>
    %177 = arith.addf %174, %176 : vector<8x128xf32>
    %cst_126 = arith.constant 0.000000e+00 : f32
    %178 = vector.broadcast %cst_126 : f32 to vector<8x128xf32>
    %179 = arith.maximumf %177, %178 : vector<8x128xf32>
    %c0_127 = arith.constant 0 : index
    %c7_128 = arith.constant 7 : index
    %c0_129 = arith.constant 0 : index
    %180 = vector.load %arg6[%c0_127, %c7_128, %c0_129] : memref<8x8x128xf32, #tpu.memory_space<vmem>>, vector<8x1x128xf32>
    %181 = vector.shape_cast %180 : vector<8x1x128xf32> to vector<8x128xf32>
    %182 = vector.shape_cast %179 : vector<8x128xf32> to vector<8x1x128xf32>
    tpu.vector_store %arg6[%c0_127, %c7_128, %c0_129], %182 {strides = array<i32>} : memref<8x8x128xf32, #tpu.memory_space<vmem>>, vector<8x1x128xf32>,
    %cst_130 = arith.constant 5.000000e-01 : f32
    %183 = vector.broadcast %cst_130 : f32 to vector<8x128xf32>
    %184 = arith.cmpf ogt, %177, %183 : vector<8x128xf32>
    %cst_131 = arith.constant 0.000000e+00 : f32
    %185 = vector.broadcast %cst_131 : f32 to vector<8x128xf32>
    %186 = arith.select %184, %185, %177 : vector<8x128xi1>, vector<8x128xf32>
    %c0_132 = arith.constant 0 : index
    %c0_133 = arith.constant 0 : index
    %187 = vector.load %arg9[%c0_132, %c0_133] : memref<8x128xf32, #tpu.memory_space<vmem>>, vector<8x128xf32>
    tpu.vector_store %arg9[%c0_132, %c0_133], %186 {strides = array<i32>} : memref<8x128xf32, #tpu.memory_space<vmem>>, vector<8x128xf32>,
    return
  }
  func.func @transform_0(%arg0: i32, %arg1: i32) -> (i32, i32, i32) {
    %c0_i32 = arith.constant 0 : i32
    %c0_i32_0 = arith.constant 0 : i32
    %c0_i32_1 = arith.constant 0 : i32
    return %c0_i32, %arg1, %c0_i32_0 : i32, i32, i32
  }
  func.func @transform_1(%arg0: i32, %arg1: i32) -> (i32, i32) {
    %c0_i32 = arith.constant 0 : i32
    %c0_i32_0 = arith.constant 0 : i32
    return %c0_i32, %arg0 : i32, i32
  }
  func.func @transform_2(%arg0: i32, %arg1: i32) -> (i32, i32) {
    %c0_i32 = arith.constant 0 : i32
    %c0_i32_0 = arith.constant 0 : i32
    return %c0_i32, %arg0 : i32, i32
  }
  func.func @transform_3(%arg0: i32, %arg1: i32) -> (i32, i32) {
    %c0_i32 = arith.constant 0 : i32
    %c0_i32_0 = arith.constant 0 : i32
    %c0_i32_1 = arith.constant 0 : i32
    return %c0_i32, %c0_i32_0 : i32, i32
  }
  func.func @transform_4(%arg0: i32, %arg1: i32) -> (i32, i32, i32) {
    %c0_i32 = arith.constant 0 : i32
    %c0_i32_0 = arith.constant 0 : i32
    return %c0_i32, %arg1, %arg0 : i32, i32, i32
  }
}

</mosaic_0001>

<llo_original>
// kernel: tpu_custom_call.1
$region0: #{tpu_custom_call.1}
  #allocation0 [shape = 'u32[]', space=smem, size = 0x4, offset = 0x4, fixed_abs, tag = 'smem constant byte address 0x4 - core index']
  #allocation1 [shape = 'u32[144,128]{1,0:T(1,128)}', space=vmem, size = 0x12000, scoped, tag = 'internal scratch']
  #allocation2 [shape = 'bf16[64,128]{1,0:T(16,128)(2,1)}', space=vmem, size = 0x4000, scoped, tag = 'scratch operand']
  #allocation3 [shape = 'f32[8,8,128]{2,1,0:T(8,128)}', space=vmem, size = 0x8000, scoped, tag = 'scratch operand']
  #allocation4 [shape = 'f32[8,128]{1,0:T(8,128)}', space=vmem, size = 0x1000, scoped, tag = 'scratch operand']
  #allocation5 [shape = 'f32[1,1]{1,0:T(1,128)S(6)}', space=smem, size = 0x200, scoped, tag = 'scoped memory for tpu_custom_call.1']
  %s0 = inlined_call_operand.hbm [shape: f32[8,8,128], index: 0, kind: input, shape index: {}]
  %s1 = inlined_call_operand.hbm [shape: bf16[128,128], index: 1, kind: input, shape index: {}]
  %s2 = inlined_call_operand.vmem [shape: f32[1,128], index: 2, kind: input, shape index: {}]
  %s3 = inlined_call_operand.<no memory space> [shape: f32[1,1], index: 3, kind: input, shape index: {}]
  %s4 = inlined_call_operand.hbm [shape: f32[8,8,128], index: 4, kind: output, shape index: {}]
  %s5 = sld [smem:[#allocation0]]
  $region38: #{tpu_custom_call.1} parent=0
    _
  %s7 = ssub.s32 1, %s5
  %s8 = scalar_select 0, %s7, %s5
  %9 = sst [smem:[#allocation5]] %s3
  $region1: #{tpu_custom_call.1} parent=0
    #allocation6 [shape = 'u8[32768]{0}', space=vmem, size = 0x8000, scoped, tag = 'input window, operand 0, single buffered']
    #allocation7 [shape = 's32[1]{0}', space=sflag, size = 0x4, scoped, tag = 'scoped memory for tpu_custom_call.1']
    #allocation8 [shape = 's32[1]{0}', space=sflag, size = 0x4, scoped, tag = 'scoped memory for tpu_custom_call.1']
    #allocation9 [shape = 'u8[32768]{0}', space=vmem, size = 0x8000, scoped, tag = 'input window, operand 1, single buffered']
    #allocation10 [shape = 's32[1]{0}', space=sflag, size = 0x4, scoped, tag = 'scoped memory for tpu_custom_call.1']
    #allocation11 [shape = 'u8[32768]{0}', space=vmem, size = 0x8000, scoped, tag = 'output window, operand 0, single buffered']
    %10 = vsyncpa [#allocation7], 0
    %11 = vsyncpa [#allocation10], 0
    %12 = vsyncpa [#allocation8], 0
    // Predicated region
    $region2: #{tpu_custom_call.1} parent=1 // pred_check
      _
    $region3: #{tpu_custom_call.1} parent=1 // pred_check_branch
      %14 = sbr.rel (0) target = $region5
    $region4: #{tpu_custom_call.1} parent=1 // pred_region
      %s16 = ssub.s32 1024, 1024
      %17 = vsyncadd [#allocation7], %s16
      %s18 = sshll.u32 [#allocation6], 4
      %s19 = int_to_ptr.vmem [resolvable:$true] %s18
      %24 = dma.hbm_to_vmem [thread:$0]  %s0, 1024, %s19, [#allocation7], 128, 128, 8
    $region5: #{tpu_custom_call.1} parent=1 // pred_fallthru
      _
    // Predicated region
    $region6: #{tpu_custom_call.1} parent=1 // pred_check
      _
    $region7: #{tpu_custom_call.1} parent=1 // pred_check_branch
      %26 = sbr.rel (0) target = $region9
    $region8: #{tpu_custom_call.1} parent=1 // pred_region
      %s28 = ssub.s32 1024, 1024
      %29 = vsyncadd [#allocation10], %s28
      %s30 = sshll.u32 [#allocation9], 4
      %s31 = int_to_ptr.vmem [resolvable:$true] %s30
      %36 = dma.hbm_to_vmem [thread:$0]  %s1, 1024, %s31, [#allocation10], 64, 64, 4
    $region9: #{tpu_custom_call.1} parent=1 // pred_fallthru
      _
    // Predicated region
    $region10: #{tpu_custom_call.1} parent=1 // pred_check
      _
    $region11: #{tpu_custom_call.1} parent=1 // pred_check_branch
      %38 = sbr.rel (0) target = $region13
    $region12: #{tpu_custom_call.1} parent=1 // pred_region
      _
    $region13: #{tpu_custom_call.1} parent=1 // pred_fallthru
      _
    // Predicated region
    $region14: #{tpu_custom_call.1} parent=1 // pred_check
      _
    $region15: #{tpu_custom_call.1} parent=1 // pred_check_branch
      %40 = sbr.rel (0) target = $region17
    $region16: #{tpu_custom_call.1} parent=1 // pred_region
      _
    $region17: #{tpu_custom_call.1} parent=1 // pred_fallthru
      _
    // Predicated region
    $region18: #{tpu_custom_call.1} parent=1 // pred_check
      _
    $region19: #{tpu_custom_call.1} parent=1 // pred_check_branch
      %42 = sbr.rel (0) target = $region21
    $region20: #{tpu_custom_call.1} parent=1 // pred_region
      %43 = dma.done [#allocation7], 1024
    $region21: #{tpu_custom_call.1} parent=1 // pred_fallthru
      _
    // Predicated region
    $region22: #{tpu_custom_call.1} parent=1 // pred_check
      _
    $region23: #{tpu_custom_call.1} parent=1 // pred_check_branch
      %45 = sbr.rel (0) target = $region25
    $region24: #{tpu_custom_call.1} parent=1 // pred_region
      %46 = dma.done [#allocation10], 1024
    $region25: #{tpu_custom_call.1} parent=1 // pred_fallthru
      _
    %v48 = vld [vmem:[#allocation6] sm:$0xff]
    %v49 = vpack.c.bf16 %v48, %v48
    %50 = vst [vmem:[#allocation2] sm:$0xf] %v49
    %s51 = scalar_lea.vmem [#allocation6], 8
    %v52 = vld [vmem:[%s51] sm:$0xff]
    %v53 = vpack.c.bf16 %v52, %v52
    %v55 = vrot.slane %v53, 4
    %57 = vst [vmem:[#allocation2] sm:$0xf0] %v55
    %s58 = scalar_lea.vmem [#allocation6], 16
    %v59 = vld [vmem:[%s58] sm:$0xff]
    %v60 = vpack.c.bf16 %v59, %v59
    %61 = vst [vmem:[#allocation2 + $0x8] sm:$0xf] %v60
    %s62 = scalar_lea.vmem [#allocation6], 24
    %v63 = vld [vmem:[%s62] sm:$0xff]
    %v64 = vpack.c.bf16 %v63, %v63
    %v66 = vrot.slane %v64, 4
    %68 = vst [vmem:[#allocation2 + $0x8] sm:$0xf0] %v66
    %s69 = scalar_lea.vmem [#allocation6], 32
    %v70 = vld [vmem:[%s69] sm:$0xff]
    %v71 = vpack.c.bf16 %v70, %v70
    %72 = vst [vmem:[#allocation2 + $0x10] sm:$0xf] %v71
    %s73 = scalar_lea.vmem [#allocation6], 40
    %v74 = vld [vmem:[%s73] sm:$0xff]
    %v75 = vpack.c.bf16 %v74, %v74
    %v77 = vrot.slane %v75, 4
    %79 = vst [vmem:[#allocation2 + $0x10] sm:$0xf0] %v77
    %s80 = scalar_lea.vmem [#allocation6], 48
    %v81 = vld [vmem:[%s80] sm:$0xff]
    %v82 = vpack.c.bf16 %v81, %v81
    %83 = vst [vmem:[#allocation2 + $0x18] sm:$0xf] %v82
    %s84 = scalar_lea.vmem [#allocation6], 56
    %v85 = vld [vmem:[%s84] sm:$0xff]
    %v86 = vpack.c.bf16 %v85, %v85
    %v88 = vrot.slane %v86, 4
    %90 = vst [vmem:[#allocation2 + $0x18] sm:$0xf0] %v88
    %v91 = vld [vmem:[#allocation2] sm:$0xff]
    %v92 = vld [vmem:[#allocation2 + $0x8] sm:$0xff]
    %v93 = vld [vmem:[#allocation2 + $0x10] sm:$0xff]
    %v94 = vld [vmem:[#allocation2 + $0x18] sm:$0xff]
    %v95 = vld [vmem:[#allocation9] sm:$0xf]
    %v96 = vld [vmem:[#allocation9 + $0x4] sm:$0xf]
    %v97 = vld [vmem:[#allocation9 + $0x8] sm:$0xf]
    %v98 = vld [vmem:[#allocation9 + $0xc] sm:$0xf]
    %v99 = vld [vmem:[#allocation9 + $0x10] sm:$0xf]
    %v100 = vld [vmem:[#allocation9 + $0x14] sm:$0xf]
    %v101 = vld [vmem:[#allocation9 + $0x18] sm:$0xf]
    %v102 = vld [vmem:[#allocation9 + $0x1c] sm:$0xf]
    %v103 = vld [vmem:[#allocation9 + $0x20] sm:$0xf]
    %v104 = vld [vmem:[#allocation9 + $0x24] sm:$0xf]
    %v105 = vld [vmem:[#allocation9 + $0x28] sm:$0xf]
    %v106 = vld [vmem:[#allocation9 + $0x2c] sm:$0xf]
    %v107 = vld [vmem:[#allocation9 + $0x30] sm:$0xf]
    %v108 = vld [vmem:[#allocation9 + $0x34] sm:$0xf]
    %v109 = vld [vmem:[#allocation9 + $0x38] sm:$0xf]
    %v110 = vld [vmem:[#allocation9 + $0x3c] sm:$0xf]
    %v111 = vld [vmem:[%s2] sm:$0x1]
    %v113 = vlaneseq
    %v114 = vshrl.u32 %v113, 7
    %v115 = vsub.s32 0, %v114
    %v116 = vrot.slane %v111, %v115
    %v134 = vunpack.c.l.b16 %v95
    %v135 = vunpack.c.l.b16 %v96
    %v136 = vunpack.c.l.b16 %v97
    %v137 = vunpack.c.l.b16 %v98
    %v138 = vunpack.c.l.b16 %v99
    %v139 = vunpack.c.l.b16 %v100
    %v140 = vunpack.c.l.b16 %v101
    %v141 = vunpack.c.l.b16 %v102
    %v142 = vunpack.c.l.b16 %v103
    %v143 = vunpack.c.l.b16 %v104
    %v144 = vunpack.c.l.b16 %v105
    %v145 = vunpack.c.l.b16 %v106
    %v146 = vunpack.c.l.b16 %v107
    %v147 = vunpack.c.l.b16 %v108
    %v148 = vunpack.c.l.b16 %v109
    %v149 = vunpack.c.l.b16 %v110
    %v150 = vpack.c.b16 %v135, %v134
    %v151 = vpack.c.b16 %v137, %v136
    %v152 = vpack.c.b16 %v139, %v138
    %v153 = vpack.c.b16 %v141, %v140
    %v154 = vpack.c.b16 %v143, %v142
    %v155 = vpack.c.b16 %v145, %v144
    %v156 = vpack.c.b16 %v147, %v146
    %v157 = vpack.c.b16 %v149, %v148
    %166 = vmatprep.subr.bf16.mxu0 0
    %167 = vmatpush1.bf16.msra.mxu0 %v150
    %168 = vmatprep.subr.bf16.mxu0 0
    %169 = vmatpush1.bf16.msra.mxu0 %v151
    %170 = vmatprep.subr.bf16.mxu0 0
    %171 = vmatpush1.bf16.msra.mxu0 %v152
    %172 = vmatprep.subr.bf16.mxu0 0
    %173 = vmatpush1.bf16.msra.mxu0 %v153
    %174 = vmatprep.subr.bf16.mxu0 0
    %175 = vmatpush1.bf16.msra.mxu0 %v154
    %176 = vmatprep.subr.bf16.mxu0 0
    %177 = vmatpush1.bf16.msra.mxu0 %v155
    %178 = vmatprep.subr.bf16.mxu0 0
    %179 = vmatpush1.bf16.msra.mxu0 %v156
    %180 = vmatprep.subr.bf16.mxu0 0
    %181 = vmatpush1.bf16.msra.mxu0 %v157
    %182 = vmatprep.subr.bf16.mxu0 0
    %183 = vmatpush1.bf16.msra.mxu0 0
    %184 = vmatprep.subr.bf16.mxu0 0
    %185 = vmatpush1.bf16.msra.mxu0 0
    %186 = vmatprep.subr.bf16.mxu0 0
    %187 = vmatpush1.bf16.msra.mxu0 0
    %188 = vmatprep.subr.bf16.mxu0 0
    %189 = vmatpush1.bf16.msra.mxu0 0
    %190 = vmatprep.subr.bf16.mxu0 0
    %191 = vmatpush1.bf16.msra.mxu0 0
    %192 = vmatprep.subr.bf16.mxu0 0
    %193 = vmatpush1.bf16.msra.mxu0 0
    %194 = vmatprep.subr.bf16.mxu0 0
    %195 = vmatpush1.bf16.msra.mxu0 0
    %196 = vmatprep.subr.bf16.mxu0 0
    %197 = vmatpush1.bf16.msra.mxu0 0
    %198 = vmatprep.mubr.bf16.mxu0 0
    %199 = vmatmul.mubr.bf16.gmra.mrb[0].mxu0 %v91
    %v200 = vpop.f32.mrb[0].mxu0
    %v201 = vadd.f32 %v116, %v200
    %v202 = vpop.f32.mrb[0].mxu0
    %v203 = vpop.f32.mrb[0].mxu0
    %v204 = vadd.f32 %v116, %v203
    %v205 = vpop.f32.mrb[0].mxu0
    %206 = vmatprep.mubr.bf16.mxu0 0
    %207 = vmatmul.mubr.bf16.gmra.mrb[0].mxu0 %v92
    %v208 = vpop.f32.mrb[0].mxu0
    %v209 = vadd.f32 %v116, %v208
    %v210 = vpop.f32.mrb[0].mxu0
    %v211 = vpop.f32.mrb[0].mxu0
    %v212 = vadd.f32 %v116, %v211
    %v213 = vpop.f32.mrb[0].mxu0
    %214 = vmatprep.mubr.bf16.mxu0 0
    %215 = vmatmul.mubr.bf16.gmra.mrb[0].mxu0 %v93
    %v216 = vpop.f32.mrb[0].mxu0
    %v217 = vadd.f32 %v116, %v216
    %v218 = vpop.f32.mrb[0].mxu0
    %v219 = vpop.f32.mrb[0].mxu0
    %v220 = vadd.f32 %v116, %v219
    %v221 = vpop.f32.mrb[0].mxu0
    %222 = vmatprep.mubr.bf16.mxu0 0
    %223 = vmatmul.mubr.bf16.gmra.mrb[0].mxu0 %v94
    %v224 = vpop.f32.mrb[0].mxu0
    %v225 = vadd.f32 %v116, %v224
    %v226 = vpop.f32.mrb[0].mxu0
    %v227 = vpop.f32.mrb[0].mxu0
    %v228 = vadd.f32 %v116, %v227
    %v229 = vpop.f32.mrb[0].mxu0
    %230 = vdwg.mxu0
    %231 = vst [vmem:[#allocation3] sm:$0xff] %v201
    %s232 = scalar_lea.vmem [#allocation3], 8
    %233 = vst [vmem:[%s232] sm:$0xff] %v204
    %s234 = scalar_lea.vmem [#allocation3], 16
    %235 = vst [vmem:[%s234] sm:$0xff] %v209
    %s236 = scalar_lea.vmem [#allocation3], 24
    %237 = vst [vmem:[%s236] sm:$0xff] %v212
    %s238 = scalar_lea.vmem [#allocation3], 32
    %239 = vst [vmem:[%s238] sm:$0xff] %v217
    %s240 = scalar_lea.vmem [#allocation3], 40
    %241 = vst [vmem:[%s240] sm:$0xff] %v220
    %s242 = scalar_lea.vmem [#allocation3], 48
    %243 = vst [vmem:[%s242] sm:$0xff] %v225
    %s244 = scalar_lea.vmem [#allocation3], 56
    %245 = vst [vmem:[%s244] sm:$0xff] %v228
    %s246 = sld [smem:[#allocation5]]
    %p247 = scmp.eq.s32.totalorder 0, 0
    // Predicated region
    $region26: #{tpu_custom_call.1} parent=1 // pred_check
      %p248 = pneg %p247
    $region27: #{tpu_custom_call.1} parent=1 // pred_check_branch
      %250 = sbr.rel (%p248) target = $region29
    $region28: #{tpu_custom_call.1} parent=1 // pred_region
      %251 = vst [vmem:[#allocation4] sm:$0xff] 0.0
    $region29: #{tpu_custom_call.1} parent=1 // pred_fallthru
      _
    %v252 = vld [vmem:[#allocation4] sm:$0xff]
    %v253 = vstv %s246
    %v254 = vmul.f32 %v252, %v253
    %v255 = vld [vmem:[#allocation3] sm:$0x1]
    %v256 = vld [vmem:[#allocation3 + $0x8] sm:$0x1]
    %v257 = vld [vmem:[#allocation3 + $0x10] sm:$0x1]
    %v258 = vld [vmem:[#allocation3 + $0x18] sm:$0x1]
    %v259 = vld [vmem:[#allocation3 + $0x20] sm:$0x1]
    %v260 = vld [vmem:[#allocation3 + $0x28] sm:$0x1]
    %v261 = vld [vmem:[#allocation3 + $0x30] sm:$0x1]
    %v262 = vld [vmem:[#allocation3 + $0x38] sm:$0x1]
    %v271 = vrot.slane %v256, 7
    %vm272 = vcmask 1041409
    %v273 = vsel %vm272, %v271, %v255
    %v274 = vrot.slane %v257, 6
    %vm275 = vcmask 1042434
    %v276 = vsel %vm275, %v274, %v273
    %v277 = vrot.slane %v258, 5
    %vm278 = vcmask 1043459
    %v279 = vsel %vm278, %v277, %v276
    %v280 = vrot.slane %v259, 4
    %vm281 = vcmask 1044484
    %v282 = vsel %vm281, %v280, %v279
    %v283 = vrot.slane %v260, 3
    %vm284 = vcmask 1045509
    %v285 = vsel %vm284, %v283, %v282
    %v286 = vrot.slane %v261, 2
    %vm287 = vcmask 1046534
    %v288 = vsel %vm287, %v286, %v285
    %v289 = vrot.slane %v262, 1
    %vm290 = vcmask 1047559
    %v291 = vsel %vm290, %v289, %v288
    %v293 = vadd.f32 %v254, %v291
    %v294 = vmax.f32 %v293, 0.0
    %v296 = vcombine.high %v294, %v294
    %v298 = vunpack.c.l.s4 1966171168
    %v299 = vunpack.c.0.s8 %v298
    %v300 = vlaneseq
    %v301 = vshrl.u32 %v300, 7
    %v302 = vsub.s32 %v299, %v301
    %v303 = vrot.slane %v294, %v302
    %v305 = vunpack.c.l.s4 1966171168
    %v306 = vunpack.c.0.s8 %v305
    %v307 = vlaneseq
    %v308 = vshrl.u32 %v307, 7
    %v309 = vsub.s32 %v306, %v308
    %v310 = vrot.slane %v296, %v309
    %v311 = vcombine.high %v303, %v303
    %v312 = vcombine.high %v310, %v310
    %v314 = vunpack.c.l.s4 1966171168
    %v315 = vunpack.c.0.s8 %v314
    %v316 = vlaneseq
    %v317 = vshrl.u32 %v316, 7
    %v318 = vsub.s32 %v315, %v317
    %v319 = vrot.slane %v303, %v318
    %v321 = vunpack.c.l.s4 1966171168
    %v322 = vunpack.c.0.s8 %v321
    %v323 = vlaneseq
    %v324 = vshrl.u32 %v323, 7
    %v325 = vsub.s32 %v322, %v324
    %v326 = vrot.slane %v310, %v325
    %v328 = vunpack.c.l.s4 1966171168
    %v329 = vunpack.c.0.s8 %v328
    %v330 = vlaneseq
    %v331 = vshrl.u32 %v330, 7
    %v332 = vsub.s32 %v329, %v331
    %v333 = vrot.slane %v311, %v332
    %v335 = vunpack.c.l.s4 1966171168
    %v336 = vunpack.c.0.s8 %v335
    %v337 = vlaneseq
    %v338 = vshrl.u32 %v337, 7
    %v339 = vsub.s32 %v336, %v338
    %v340 = vrot.slane %v312, %v339
    %v341 = vcombine.high %v319, %v319
    %v342 = vcombine.high %v326, %v326
    %v343 = vcombine.high %v333, %v333
    %v344 = vcombine.high %v340, %v340
    %353 = vst [vmem:[#allocation11] sm:$0x1] %v319
    %354 = vst [vmem:[#allocation11 + $0x8] sm:$0x1] %v333
    %355 = vst [vmem:[#allocation11 + $0x10] sm:$0x1] %v341
    %356 = vst [vmem:[#allocation11 + $0x18] sm:$0x1] %v343
    %357 = vst [vmem:[#allocation11 + $0x20] sm:$0x1] %v326
    %358 = vst [vmem:[#allocation11 + $0x28] sm:$0x1] %v340
    %359 = vst [vmem:[#allocation11 + $0x30] sm:$0x1] %v342
    %360 = vst [vmem:[#allocation11 + $0x38] sm:$0x1] %v344
    %vm361 = vcmp.gt.f32.partialorder %v293, 0.5
    %v362 = vsel %vm361, 0.0, %v293
    %v363 = vmul.f32 %v362, %v253
    %v364 = vld [vmem:[#allocation3 + $0x1] sm:$0x1]
    %v365 = vld [vmem:[#allocation3 + $0x9] sm:$0x1]
    %v366 = vld [vmem:[#allocation3 + $0x11] sm:$0x1]
    %v367 = vld [vmem:[#allocation3 + $0x19] sm:$0x1]
    %v368 = vld [vmem:[#allocation3 + $0x21] sm:$0x1]
    %v369 = vld [vmem:[#allocation3 + $0x29] sm:$0x1]
    %v370 = vld [vmem:[#allocation3 + $0x31] sm:$0x1]
    %v371 = vld [vmem:[#allocation3 + $0x39] sm:$0x1]
    %v380 = vrot.slane %v365, 7
    %v381 = vsel %vm272, %v380, %v364
    %v382 = vrot.slane %v366, 6
    %v383 = vsel %vm275, %v382, %v381
    %v384 = vrot.slane %v367, 5
    %v385 = vsel %vm278, %v384, %v383
    %v386 = vrot.slane %v368, 4
    %v387 = vsel %vm281, %v386, %v385
    %v388 = vrot.slane %v369, 3
    %v389 = vsel %vm284, %v388, %v387
    %v390 = vrot.slane %v370, 2
    %v391 = vsel %vm287, %v390, %v389
    %v392 = vrot.slane %v371, 1
    %v393 = vsel %vm290, %v392, %v391
    %v395 = vadd.f32 %v363, %v393
    %v396 = vmax.f32 %v395, 0.0
    %v398 = vcombine.high %v396, %v396
    %v400 = vunpack.c.l.s4 1966171168
    %v401 = vunpack.c.0.s8 %v400
    %v402 = vlaneseq
    %v403 = vshrl.u32 %v402, 7
    %v404 = vsub.s32 %v401, %v403
    %v405 = vrot.slane %v396, %v404
    %v407 = vunpack.c.l.s4 1966171168
    %v408 = vunpack.c.0.s8 %v407
    %v409 = vlaneseq
    %v410 = vshrl.u32 %v409, 7
    %v411 = vsub.s32 %v408, %v410
    %v412 = vrot.slane %v398, %v411
    %v413 = vcombine.high %v405, %v405
    %v414 = vcombine.high %v412, %v412
    %v416 = vunpack.c.l.s4 1966171168
    %v417 = vunpack.c.0.s8 %v416
    %v418 = vlaneseq
    %v419 = vshrl.u32 %v418, 7
    %v420 = vsub.s32 %v417, %v419
    %v421 = vrot.slane %v405, %v420
    %v423 = vunpack.c.l.s4 1966171168
    %v424 = vunpack.c.0.s8 %v423
    %v425 = vlaneseq
    %v426 = vshrl.u32 %v425, 7
    %v427 = vsub.s32 %v424, %v426
    %v428 = vrot.slane %v412, %v427
    %v430 = vunpack.c.l.s4 1966171168
    %v431 = vunpack.c.0.s8 %v430
    %v432 = vlaneseq
    %v433 = vshrl.u32 %v432, 7
    %v434 = vsub.s32 %v431, %v433
    %v435 = vrot.slane %v413, %v434
    %v437 = vunpack.c.l.s4 1966171168
    %v438 = vunpack.c.0.s8 %v437
    %v439 = vlaneseq
    %v440 = vshrl.u32 %v439, 7
    %v441 = vsub.s32 %v438, %v440
    %v442 = vrot.slane %v414, %v441
    %v443 = vcombine.high %v421, %v421
    %v444 = vcombine.high %v428, %v428
    %v445 = vcombine.high %v435, %v435
    %v446 = vcombine.high %v442, %v442
    %455 = vst [vmem:[#allocation11 + $0x1] sm:$0x1] %v421
    %456 = vst [vmem:[#allocation11 + $0x9] sm:$0x1] %v435
    %457 = vst [vmem:[#allocation11 + $0x11] sm:$0x1] %v443
    %458 = vst [vmem:[#allocation11 + $0x19] sm:$0x1] %v445
    %459 = vst [vmem:[#allocation11 + $0x21] sm:$0x1] %v428
    %460 = vst [vmem:[#allocation11 + $0x29] sm:$0x1] %v442
    %461 = vst [vmem:[#allocation11 + $0x31] sm:$0x1] %v444
    %462 = vst [vmem:[#allocation11 + $0x39] sm:$0x1] %v446
    %vm463 = vcmp.gt.f32.partialorder %v395, 0.5
    %v464 = vsel %vm463, 0.0, %v395
    %v465 = vmul.f32 %v464, %v253
    %v466 = vld [vmem:[#allocation3 + $0x2] sm:$0x1]
    %v467 = vld [vmem:[#allocation3 + $0xa] sm:$0x1]
    %v468 = vld [vmem:[#allocation3 + $0x12] sm:$0x1]
    %v469 = vld [vmem:[#allocation3 + $0x1a] sm:$0x1]
    %v470 = vld [vmem:[#allocation3 + $0x22] sm:$0x1]
    %v471 = vld [vmem:[#allocation3 + $0x2a] sm:$0x1]
    %v472 = vld [vmem:[#allocation3 + $0x32] sm:$0x1]
    %v473 = vld [vmem:[#allocation3 + $0x3a] sm:$0x1]
    %v482 = vrot.slane %v467, 7
    %v483 = vsel %vm272, %v482, %v466
    %v484 = vrot.slane %v468, 6
    %v485 = vsel %vm275, %v484, %v483
    %v486 = vrot.slane %v469, 5
    %v487 = vsel %vm278, %v486, %v485
    %v488 = vrot.slane %v470, 4
    %v489 = vsel %vm281, %v488, %v487
    %v490 = vrot.slane %v471, 3
    %v491 = vsel %vm284, %v490, %v489
    %v492 = vrot.slane %v472, 2
    %v493 = vsel %vm287, %v492, %v491
    %v494 = vrot.slane %v473, 1
    %v495 = vsel %vm290, %v494, %v493
    %v497 = vadd.f32 %v465, %v495
    %v498 = vmax.f32 %v497, 0.0
    %v500 = vcombine.high %v498, %v498
    %v502 = vunpack.c.l.s4 1966171168
    %v503 = vunpack.c.0.s8 %v502
    %v504 = vlaneseq
    %v505 = vshrl.u32 %v504, 7
    %v506 = vsub.s32 %v503, %v505
    %v507 = vrot.slane %v498, %v506
    %v509 = vunpack.c.l.s4 1966171168
    %v510 = vunpack.c.0.s8 %v509
    %v511 = vlaneseq
    %v512 = vshrl.u32 %v511, 7
    %v513 = vsub.s32 %v510, %v512
    %v514 = vrot.slane %v500, %v513
    %v515 = vcombine.high %v507, %v507
    %v516 = vcombine.high %v514, %v514
    %v518 = vunpack.c.l.s4 1966171168
    %v519 = vunpack.c.0.s8 %v518
    %v520 = vlaneseq
    %v521 = vshrl.u32 %v520, 7
    %v522 = vsub.s32 %v519, %v521
    %v523 = vrot.slane %v507, %v522
    %v525 = vunpack.c.l.s4 1966171168
    %v526 = vunpack.c.0.s8 %v525
    %v527 = vlaneseq
    %v528 = vshrl.u32 %v527, 7
    %v529 = vsub.s32 %v526, %v528
    %v530 = vrot.slane %v514, %v529
    %v532 = vunpack.c.l.s4 1966171168
    %v533 = vunpack.c.0.s8 %v532
    %v534 = vlaneseq
    %v535 = vshrl.u32 %v534, 7
    %v536 = vsub.s32 %v533, %v535
    %v537 = vrot.slane %v515, %v536
    %v539 = vunpack.c.l.s4 1966171168
    %v540 = vunpack.c.0.s8 %v539
    %v541 = vlaneseq
    %v542 = vshrl.u32 %v541, 7
    %v543 = vsub.s32 %v540, %v542
    %v544 = vrot.slane %v516, %v543
    %v545 = vcombine.high %v523, %v523
    %v546 = vcombine.high %v530, %v530
    %v547 = vcombine.high %v537, %v537
    %v548 = vcombine.high %v544, %v544
    %557 = vst [vmem:[#allocation11 + $0x2] sm:$0x1] %v523
    %558 = vst [vmem:[#allocation11 + $0xa] sm:$0x1] %v537
    %559 = vst [vmem:[#allocation11 + $0x12] sm:$0x1] %v545
    %560 = vst [vmem:[#allocation11 + $0x1a] sm:$0x1] %v547
    %561 = vst [vmem:[#allocation11 + $0x22] sm:$0x1] %v530
    %562 = vst [vmem:[#allocation11 + $0x2a] sm:$0x1] %v544
    %563 = vst [vmem:[#allocation11 + $0x32] sm:$0x1] %v546
    %564 = vst [vmem:[#allocation11 + $0x3a] sm:$0x1] %v548
    %vm565 = vcmp.gt.f32.partialorder %v497, 0.5
    %v566 = vsel %vm565, 0.0, %v497
    %v567 = vmul.f32 %v566, %v253
    %v568 = vld [vmem:[#allocation3 + $0x3] sm:$0x1]
    %v569 = vld [vmem:[#allocation3 + $0xb] sm:$0x1]
    %v570 = vld [vmem:[#allocation3 + $0x13] sm:$0x1]
    %v571 = vld [vmem:[#allocation3 + $0x1b] sm:$0x1]
    %v572 = vld [vmem:[#allocation3 + $0x23] sm:$0x1]
    %v573 = vld [vmem:[#allocation3 + $0x2b] sm:$0x1]
    %v574 = vld [vmem:[#allocation3 + $0x33] sm:$0x1]
    %v575 = vld [vmem:[#allocation3 + $0x3b] sm:$0x1]
    %v584 = vrot.slane %v569, 7
    %v585 = vsel %vm272, %v584, %v568
    %v586 = vrot.slane %v570, 6
    %v587 = vsel %vm275, %v586, %v585
    %v588 = vrot.slane %v571, 5
    %v589 = vsel %vm278, %v588, %v587
    %v590 = vrot.slane %v572, 4
    %v591 = vsel %vm281, %v590, %v589
    %v592 = vrot.slane %v573, 3
    %v593 = vsel %vm284, %v592, %v591
    %v594 = vrot.slane %v574, 2
    %v595 = vsel %vm287, %v594, %v593
    %v596 = vrot.slane %v575, 1
    %v597 = vsel %vm290, %v596, %v595
    %v599 = vadd.f32 %v567, %v597
    %v600 = vmax.f32 %v599, 0.0
    %v602 = vcombine.high %v600, %v600
    %v604 = vunpack.c.l.s4 1966171168
    %v605 = vunpack.c.0.s8 %v604
    %v606 = vlaneseq
    %v607 = vshrl.u32 %v606, 7
    %v608 = vsub.s32 %v605, %v607
    %v609 = vrot.slane %v600, %v608
    %v611 = vunpack.c.l.s4 1966171168
    %v612 = vunpack.c.0.s8 %v611
    %v613 = vlaneseq
    %v614 = vshrl.u32 %v613, 7
    %v615 = vsub.s32 %v612, %v614
    %v616 = vrot.slane %v602, %v615
    %v617 = vcombine.high %v609, %v609
    %v618 = vcombine.high %v616, %v616
    %v620 = vunpack.c.l.s4 1966171168
    %v621 = vunpack.c.0.s8 %v620
    %v622 = vlaneseq
    %v623 = vshrl.u32 %v622, 7
    %v624 = vsub.s32 %v621, %v623
    %v625 = vrot.slane %v609, %v624
    %v627 = vunpack.c.l.s4 1966171168
    %v628 = vunpack.c.0.s8 %v627
    %v629 = vlaneseq
    %v630 = vshrl.u32 %v629, 7
    %v631 = vsub.s32 %v628, %v630
    %v632 = vrot.slane %v616, %v631
    %v634 = vunpack.c.l.s4 1966171168
    %v635 = vunpack.c.0.s8 %v634
    %v636 = vlaneseq
    %v637 = vshrl.u32 %v636, 7
    %v638 = vsub.s32 %v635, %v637
    %v639 = vrot.slane %v617, %v638
    %v641 = vunpack.c.l.s4 1966171168
    %v642 = vunpack.c.0.s8 %v641
    %v643 = vlaneseq
    %v644 = vshrl.u32 %v643, 7
    %v645 = vsub.s32 %v642, %v644
    %v646 = vrot.slane %v618, %v645
    %v647 = vcombine.high %v625, %v625
    %v648 = vcombine.high %v632, %v632
    %v649 = vcombine.high %v639, %v639
    %v650 = vcombine.high %v646, %v646
    %659 = vst [vmem:[#allocation11 + $0x3] sm:$0x1] %v625
    %660 = vst [vmem:[#allocation11 + $0xb] sm:$0x1] %v639
    %661 = vst [vmem:[#allocation11 + $0x13] sm:$0x1] %v647
    %662 = vst [vmem:[#allocation11 + $0x1b] sm:$0x1] %v649
    %663 = vst [vmem:[#allocation11 + $0x23] sm:$0x1] %v632
    %664 = vst [vmem:[#allocation11 + $0x2b] sm:$0x1] %v646
    %665 = vst [vmem:[#allocation11 + $0x33] sm:$0x1] %v648
    %666 = vst [vmem:[#allocation11 + $0x3b] sm:$0x1] %v650
    %vm667 = vcmp.gt.f32.partialorder %v599, 0.5
    %v668 = vsel %vm667, 0.0, %v599
    %v669 = vmul.f32 %v668, %v253
    %v670 = vld [vmem:[#allocation3 + $0x4] sm:$0x1]
    %v671 = vld [vmem:[#allocation3 + $0xc] sm:$0x1]
    %v672 = vld [vmem:[#allocation3 + $0x14] sm:$0x1]
    %v673 = vld [vmem:[#allocation3 + $0x1c] sm:$0x1]
    %v674 = vld [vmem:[#allocation3 + $0x24] sm:$0x1]
    %v675 = vld [vmem:[#allocation3 + $0x2c] sm:$0x1]
    %v676 = vld [vmem:[#allocation3 + $0x34] sm:$0x1]
    %v677 = vld [vmem:[#allocation3 + $0x3c] sm:$0x1]
    %v686 = vrot.slane %v671, 7
    %v687 = vsel %vm272, %v686, %v670
    %v688 = vrot.slane %v672, 6
    %v689 = vsel %vm275, %v688, %v687
    %v690 = vrot.slane %v673, 5
    %v691 = vsel %vm278, %v690, %v689
    %v692 = vrot.slane %v674, 4
    %v693 = vsel %vm281, %v692, %v691
    %v694 = vrot.slane %v675, 3
    %v695 = vsel %vm284, %v694, %v693
    %v696 = vrot.slane %v676, 2
    %v697 = vsel %vm287, %v696, %v695
    %v698 = vrot.slane %v677, 1
    %v699 = vsel %vm290, %v698, %v697
    %v701 = vadd.f32 %v669, %v699
    %v702 = vmax.f32 %v701, 0.0
    %v704 = vcombine.high %v702, %v702
    %v706 = vunpack.c.l.s4 1966171168
    %v707 = vunpack.c.0.s8 %v706
    %v708 = vlaneseq
    %v709 = vshrl.u32 %v708, 7
    %v710 = vsub.s32 %v707, %v709
    %v711 = vrot.slane %v702, %v710
    %v713 = vunpack.c.l.s4 1966171168
    %v714 = vunpack.c.0.s8 %v713
    %v715 = vlaneseq
    %v716 = vshrl.u32 %v715, 7
    %v717 = vsub.s32 %v714, %v716
    %v718 = vrot.slane %v704, %v717
    %v719 = vcombine.high %v711, %v711
    %v720 = vcombine.high %v718, %v718
    %v722 = vunpack.c.l.s4 1966171168
    %v723 = vunpack.c.0.s8 %v722
    %v724 = vlaneseq
    %v725 = vshrl.u32 %v724, 7
    %v726 = vsub.s32 %v723, %v725
    %v727 = vrot.slane %v711, %v726
    %v729 = vunpack.c.l.s4 1966171168
    %v730 = vunpack.c.0.s8 %v729
    %v731 = vlaneseq
    %v732 = vshrl.u32 %v731, 7
    %v733 = vsub.s32 %v730, %v732
    %v734 = vrot.slane %v718, %v733
    %v736 = vunpack.c.l.s4 1966171168
    %v737 = vunpack.c.0.s8 %v736
    %v738 = vlaneseq
    %v739 = vshrl.u32 %v738, 7
    %v740 = vsub.s32 %v737, %v739
    %v741 = vrot.slane %v719, %v740
    %v743 = vunpack.c.l.s4 1966171168
    %v744 = vunpack.c.0.s8 %v743
    %v745 = vlaneseq
    %v746 = vshrl.u32 %v745, 7
    %v747 = vsub.s32 %v744, %v746
    %v748 = vrot.slane %v720, %v747
    %v749 = vcombine.high %v727, %v727
    %v750 = vcombine.high %v734, %v734
    %v751 = vcombine.high %v741, %v741
    %v752 = vcombine.high %v748, %v748
    %761 = vst [vmem:[#allocation11 + $0x4] sm:$0x1] %v727
    %762 = vst [vmem:[#allocation11 + $0xc] sm:$0x1] %v741
    %763 = vst [vmem:[#allocation11 + $0x14] sm:$0x1] %v749
    %764 = vst [vmem:[#allocation11 + $0x1c] sm:$0x1] %v751
    %765 = vst [vmem:[#allocation11 + $0x24] sm:$0x1] %v734
    %766 = vst [vmem:[#allocation11 + $0x2c] sm:$0x1] %v748
    %767 = vst [vmem:[#allocation11 + $0x34] sm:$0x1] %v750
    %768 = vst [vmem:[#allocation11 + $0x3c] sm:$0x1] %v752
    %vm769 = vcmp.gt.f32.partialorder %v701, 0.5
    %v770 = vsel %vm769, 0.0, %v701
    %v771 = vmul.f32 %v770, %v253
    %v772 = vld [vmem:[#allocation3 + $0x5] sm:$0x1]
    %v773 = vld [vmem:[#allocation3 + $0xd] sm:$0x1]
    %v774 = vld [vmem:[#allocation3 + $0x15] sm:$0x1]
    %v775 = vld [vmem:[#allocation3 + $0x1d] sm:$0x1]
    %v776 = vld [vmem:[#allocation3 + $0x25] sm:$0x1]
    %v777 = vld [vmem:[#allocation3 + $0x2d] sm:$0x1]
    %v778 = vld [vmem:[#allocation3 + $0x35] sm:$0x1]
    %v779 = vld [vmem:[#allocation3 + $0x3d] sm:$0x1]
    %v788 = vrot.slane %v773, 7
    %v789 = vsel %vm272, %v788, %v772
    %v790 = vrot.slane %v774, 6
    %v791 = vsel %vm275, %v790, %v789
    %v792 = vrot.slane %v775, 5
    %v793 = vsel %vm278, %v792, %v791
    %v794 = vrot.slane %v776, 4
    %v795 = vsel %vm281, %v794, %v793
    %v796 = vrot.slane %v777, 3
    %v797 = vsel %vm284, %v796, %v795
    %v798 = vrot.slane %v778, 2
    %v799 = vsel %vm287, %v798, %v797
    %v800 = vrot.slane %v779, 1
    %v801 = vsel %vm290, %v800, %v799
    %v803 = vadd.f32 %v771, %v801
    %v804 = vmax.f32 %v803, 0.0
    %v806 = vcombine.high %v804, %v804
    %v808 = vunpack.c.l.s4 1966171168
    %v809 = vunpack.c.0.s8 %v808
    %v810 = vlaneseq
    %v811 = vshrl.u32 %v810, 7
    %v812 = vsub.s32 %v809, %v811
    %v813 = vrot.slane %v804, %v812
    %v815 = vunpack.c.l.s4 1966171168
    %v816 = vunpack.c.0.s8 %v815
    %v817 = vlaneseq
    %v818 = vshrl.u32 %v817, 7
    %v819 = vsub.s32 %v816, %v818
    %v820 = vrot.slane %v806, %v819
    %v821 = vcombine.high %v813, %v813
    %v822 = vcombine.high %v820, %v820
    %v824 = vunpack.c.l.s4 1966171168
    %v825 = vunpack.c.0.s8 %v824
    %v826 = vlaneseq
    %v827 = vshrl.u32 %v826, 7
    %v828 = vsub.s32 %v825, %v827
    %v829 = vrot.slane %v813, %v828
    %v831 = vunpack.c.l.s4 1966171168
    %v832 = vunpack.c.0.s8 %v831
    %v833 = vlaneseq
    %v834 = vshrl.u32 %v833, 7
    %v835 = vsub.s32 %v832, %v834
    %v836 = vrot.slane %v820, %v835
    %v838 = vunpack.c.l.s4 1966171168
    %v839 = vunpack.c.0.s8 %v838
    %v840 = vlaneseq
    %v841 = vshrl.u32 %v840, 7
    %v842 = vsub.s32 %v839, %v841
    %v843 = vrot.slane %v821, %v842
    %v845 = vunpack.c.l.s4 1966171168
    %v846 = vunpack.c.0.s8 %v845
    %v847 = vlaneseq
    %v848 = vshrl.u32 %v847, 7
    %v849 = vsub.s32 %v846, %v848
    %v850 = vrot.slane %v822, %v849
    %v851 = vcombine.high %v829, %v829
    %v852 = vcombine.high %v836, %v836
    %v853 = vcombine.high %v843, %v843
    %v854 = vcombine.high %v850, %v850
    %863 = vst [vmem:[#allocation11 + $0x5] sm:$0x1] %v829
    %864 = vst [vmem:[#allocation11 + $0xd] sm:$0x1] %v843
    %865 = vst [vmem:[#allocation11 + $0x15] sm:$0x1] %v851
    %866 = vst [vmem:[#allocation11 + $0x1d] sm:$0x1] %v853
    %867 = vst [vmem:[#allocation11 + $0x25] sm:$0x1] %v836
    %868 = vst [vmem:[#allocation11 + $0x2d] sm:$0x1] %v850
    %869 = vst [vmem:[#allocation11 + $0x35] sm:$0x1] %v852
    %870 = vst [vmem:[#allocation11 + $0x3d] sm:$0x1] %v854
    %vm871 = vcmp.gt.f32.partialorder %v803, 0.5
    %v872 = vsel %vm871, 0.0, %v803
    %v873 = vmul.f32 %v872, %v253
    %v874 = vld [vmem:[#allocation3 + $0x6] sm:$0x1]
    %v875 = vld [vmem:[#allocation3 + $0xe] sm:$0x1]
    %v876 = vld [vmem:[#allocation3 + $0x16] sm:$0x1]
    %v877 = vld [vmem:[#allocation3 + $0x1e] sm:$0x1]
    %v878 = vld [vmem:[#allocation3 + $0x26] sm:$0x1]
    %v879 = vld [vmem:[#allocation3 + $0x2e] sm:$0x1]
    %v880 = vld [vmem:[#allocation3 + $0x36] sm:$0x1]
    %v881 = vld [vmem:[#allocation3 + $0x3e] sm:$0x1]
    %v890 = vrot.slane %v875, 7
    %v891 = vsel %vm272, %v890, %v874
    %v892 = vrot.slane %v876, 6
    %v893 = vsel %vm275, %v892, %v891
    %v894 = vrot.slane %v877, 5
    %v895 = vsel %vm278, %v894, %v893
    %v896 = vrot.slane %v878, 4
    %v897 = vsel %vm281, %v896, %v895
    %v898 = vrot.slane %v879, 3
    %v899 = vsel %vm284, %v898, %v897
    %v900 = vrot.slane %v880, 2
    %v901 = vsel %vm287, %v900, %v899
    %v902 = vrot.slane %v881, 1
    %v903 = vsel %vm290, %v902, %v901
    %v905 = vadd.f32 %v873, %v903
    %v906 = vmax.f32 %v905, 0.0
    %v908 = vcombine.high %v906, %v906
    %v910 = vunpack.c.l.s4 1966171168
    %v911 = vunpack.c.0.s8 %v910
    %v912 = vlaneseq
    %v913 = vshrl.u32 %v912, 7
    %v914 = vsub.s32 %v911, %v913
    %v915 = vrot.slane %v906, %v914
    %v917 = vunpack.c.l.s4 1966171168
    %v918 = vunpack.c.0.s8 %v917
    %v919 = vlaneseq
    %v920 = vshrl.u32 %v919, 7
    %v921 = vsub.s32 %v918, %v920
    %v922 = vrot.slane %v908, %v921
    %v923 = vcombine.high %v915, %v915
    %v924 = vcombine.high %v922, %v922
    %v926 = vunpack.c.l.s4 1966171168
    %v927 = vunpack.c.0.s8 %v926
    %v928 = vlaneseq
    %v929 = vshrl.u32 %v928, 7
    %v930 = vsub.s32 %v927, %v929
    %v931 = vrot.slane %v915, %v930
    %v933 = vunpack.c.l.s4 1966171168
    %v934 = vunpack.c.0.s8 %v933
    %v935 = vlaneseq
    %v936 = vshrl.u32 %v935, 7
    %v937 = vsub.s32 %v934, %v936
    %v938 = vrot.slane %v922, %v937
    %v940 = vunpack.c.l.s4 1966171168
    %v941 = vunpack.c.0.s8 %v940
    %v942 = vlaneseq
    %v943 = vshrl.u32 %v942, 7
    %v944 = vsub.s32 %v941, %v943
    %v945 = vrot.slane %v923, %v944
    %v947 = vunpack.c.l.s4 1966171168
    %v948 = vunpack.c.0.s8 %v947
    %v949 = vlaneseq
    %v950 = vshrl.u32 %v949, 7
    %v951 = vsub.s32 %v948, %v950
    %v952 = vrot.slane %v924, %v951
    %v953 = vcombine.high %v931, %v931
    %v954 = vcombine.high %v938, %v938
    %v955 = vcombine.high %v945, %v945
    %v956 = vcombine.high %v952, %v952
    %965 = vst [vmem:[#allocation11 + $0x6] sm:$0x1] %v931
    %966 = vst [vmem:[#allocation11 + $0xe] sm:$0x1] %v945
    %967 = vst [vmem:[#allocation11 + $0x16] sm:$0x1] %v953
    %968 = vst [vmem:[#allocation11 + $0x1e] sm:$0x1] %v955
    %969 = vst [vmem:[#allocation11 + $0x26] sm:$0x1] %v938
    %970 = vst [vmem:[#allocation11 + $0x2e] sm:$0x1] %v952
    %971 = vst [vmem:[#allocation11 + $0x36] sm:$0x1] %v954
    %972 = vst [vmem:[#allocation11 + $0x3e] sm:$0x1] %v956
    %vm973 = vcmp.gt.f32.partialorder %v905, 0.5
    %v974 = vsel %vm973, 0.0, %v905
    %v975 = vmul.f32 %v974, %v253
    %v976 = vld [vmem:[#allocation3 + $0x7] sm:$0x1]
    %v977 = vld [vmem:[#allocation3 + $0xf] sm:$0x1]
    %v978 = vld [vmem:[#allocation3 + $0x17] sm:$0x1]
    %v979 = vld [vmem:[#allocation3 + $0x1f] sm:$0x1]
    %v980 = vld [vmem:[#allocation3 + $0x27] sm:$0x1]
    %v981 = vld [vmem:[#allocation3 + $0x2f] sm:$0x1]
    %v982 = vld [vmem:[#allocation3 + $0x37] sm:$0x1]
    %v983 = vld [vmem:[#allocation3 + $0x3f] sm:$0x1]
    %v992 = vrot.slane %v977, 7
    %v993 = vsel %vm272, %v992, %v976
    %v994 = vrot.slane %v978, 6
    %v995 = vsel %vm275, %v994, %v993
    %v996 = vrot.slane %v979, 5
    %v997 = vsel %vm278, %v996, %v995
    %v998 = vrot.slane %v980, 4
    %v999 = vsel %vm281, %v998, %v997
    %v1000 = vrot.slane %v981, 3
    %v1001 = vsel %vm284, %v1000, %v999
    %v1002 = vrot.slane %v982, 2
    %v1003 = vsel %vm287, %v1002, %v1001
    %v1004 = vrot.slane %v983, 1
    %v1005 = vsel %vm290, %v1004, %v1003
    %v1007 = vadd.f32 %v975, %v1005
    %v1008 = vmax.f32 %v1007, 0.0
    %v1010 = vcombine.high %v1008, %v1008
    %v1012 = vunpack.c.l.s4 1966171168
    %v1013 = vunpack.c.0.s8 %v1012
    %v1014 = vlaneseq
    %v1015 = vshrl.u32 %v1014, 7
    %v1016 = vsub.s32 %v1013, %v1015
    %v1017 = vrot.slane %v1008, %v1016
    %v1019 = vunpack.c.l.s4 1966171168
    %v1020 = vunpack.c.0.s8 %v1019
    %v1021 = vlaneseq
    %v1022 = vshrl.u32 %v1021, 7
    %v1023 = vsub.s32 %v1020, %v1022
    %v1024 = vrot.slane %v1010, %v1023
    %v1025 = vcombine.high %v1017, %v1017
    %v1026 = vcombine.high %v1024, %v1024
    %v1028 = vunpack.c.l.s4 1966171168
    %v1029 = vunpack.c.0.s8 %v1028
    %v1030 = vlaneseq
    %v1031 = vshrl.u32 %v1030, 7
    %v1032 = vsub.s32 %v1029, %v1031
    %v1033 = vrot.slane %v1017, %v1032
    %v1035 = vunpack.c.l.s4 1966171168
    %v1036 = vunpack.c.0.s8 %v1035
    %v1037 = vlaneseq
    %v1038 = vshrl.u32 %v1037, 7
    %v1039 = vsub.s32 %v1036, %v1038
    %v1040 = vrot.slane %v1024, %v1039
    %v1042 = vunpack.c.l.s4 1966171168
    %v1043 = vunpack.c.0.s8 %v1042
    %v1044 = vlaneseq
    %v1045 = vshrl.u32 %v1044, 7
    %v1046 = vsub.s32 %v1043, %v1045
    %v1047 = vrot.slane %v1025, %v1046
    %v1049 = vunpack.c.l.s4 1966171168
    %v1050 = vunpack.c.0.s8 %v1049
    %v1051 = vlaneseq
    %v1052 = vshrl.u32 %v1051, 7
    %v1053 = vsub.s32 %v1050, %v1052
    %v1054 = vrot.slane %v1026, %v1053
    %v1055 = vcombine.high %v1033, %v1033
    %v1056 = vcombine.high %v1040, %v1040
    %v1057 = vcombine.high %v1047, %v1047
    %v1058 = vcombine.high %v1054, %v1054
    %1067 = vst [vmem:[#allocation11 + $0x7] sm:$0x1] %v1033
    %1068 = vst [vmem:[#allocation11 + $0xf] sm:$0x1] %v1047
    %1069 = vst [vmem:[#allocation11 + $0x17] sm:$0x1] %v1055
    %1070 = vst [vmem:[#allocation11 + $0x1f] sm:$0x1] %v1057
    %1071 = vst [vmem:[#allocation11 + $0x27] sm:$0x1] %v1040
    %1072 = vst [vmem:[#allocation11 + $0x2f] sm:$0x1] %v1054
    %1073 = vst [vmem:[#allocation11 + $0x37] sm:$0x1] %v1056
    %1074 = vst [vmem:[#allocation11 + $0x3f] sm:$0x1] %v1058
    %vm1075 = vcmp.gt.f32.partialorder %v1007, 0.5
    %v1076 = vsel %vm1075, 0.0, %v1007
    %1077 = vst [vmem:[#allocation4] sm:$0xff] %v1076
    // Predicated region
    $region30: #{tpu_custom_call.1} parent=1 // pred_check
      _
    $region31: #{tpu_custom_call.1} parent=1 // pred_check_branch
      %1079 = sbr.rel (0) target = $region33
    $region32: #{tpu_custom_call.1} parent=1 // pred_region
      %s1081 = ssub.s32 1024, 1024
      %1082 = vsyncadd [#allocation8], %s1081
      %s1083 = sshll.u32 [#allocation11], 4
      %s1084 = int_to_ptr.vmem [resolvable:$true] %s1083
      %1089 = dma.vmem_to_hbm [thread:$0]  %s1084, 1024, %s4, [#allocation8], 128, 128, 8
    $region33: #{tpu_custom_call.1} parent=1 // pred_fallthru
      _
    // Predicated region
    $region34: #{tpu_custom_call.1} parent=1 // pred_check
      _
    $region35: #{tpu_custom_call.1} parent=1 // pred_check_branch
      %1091 = sbr.rel (0) target = $region37
    $region36: #{tpu_custom_call.1} parent=1 // pred_region
      %1092 = dma.done [#allocation8], 1024
    $region37: #{tpu_custom_call.1} parent=1 // pred_fallthru
      _
    %1093 = vsyncpa [#allocation7], 1
    %1094 = vsyncpa [#allocation10], 1
    %1095 = vsyncpa [#allocation8], 1

</llo_original>
